<compile_context>
chip_gen: v5e
topology: v5e:2x2
jax: 0.10.0
libtpu: 0.0.40
codegen_flags: <defaults>
</compile_context>

<pallas_src>
import jax
import jax.numpy as jnp
from jax import lax
from jax.experimental import pallas as pl
from jax.experimental.pallas import tpu as pltpu


# ---------------------------------------------------------------------------
# Kernels
# ---------------------------------------------------------------------------

def _dw_pw_kernel(x_ref, halo_ref, wd_ref, wp_ref, ss_ref, o_ref):
    """Depthwise 3x3 -> pointwise 1x1 -> BN -> ReLU for one (batch, row-tile) step.

    x_ref    : (TH, Wp, Cp)    bf16 activation row tile (no halo rows)
    halo_ref : (2, Wp, Cp)     bf16 [row above tile, row below tile] (zeros at image edge)
    wd_ref   : (3, 3, Cp)      f32 depthwise weights
    wp_ref   : (Cp, Coutp)     bf16 pointwise weights (unscaled)
    ss_ref   : (2, Coutp)      f32 [BN scale ; BN shift]
    o_ref    : (TH, Wp, Coutp) f32 output tile (lane-dense: Coutp % 128 == 0)
    """
    TH, Wp, Cp = x_ref.shape
    Coutp = o_ref.shape[-1]

    x = x_ref[...]            # bf16 in VMEM (half the DMA bytes of f32)
    halo = halo_ref[...]
    wd = wd_ref[...]          # hoisted single load

    col = lax.broadcasted_iota(jnp.int32, (1, Wp, 1), 1)
    left = col == 0
    right = col == Wp - 1

    # 3x3 depthwise, stride 1.  One kh row-slab at a time is upcast to f32, rolled
    # along W (XLU slot, effectively free) and consumed immediately -> only ~2
    # tile-sized f32 slabs live at once (slab + acc), no big x/x_m/x_p triple.
    acc = None
    for kh in range(3):
        if kh == 0:
            slab = jnp.concatenate([halo[0:1], x[:TH - 1]], axis=0)   # rows h-1
        elif kh == 1:
            slab = x                                                   # rows h
        else:
            slab = jnp.concatenate([x[1:], halo[1:2]], axis=0)         # rows h+1
        slab = slab.astype(jnp.float32)
        xc = slab * wd[kh, 1]
        xl = jnp.where(left, 0.0, pltpu.roll(slab, shift=1, axis=1)) * wd[kh, 0]
        xr = jnp.where(right, 0.0, pltpu.roll(slab, shift=Wp - 1, axis=1)) * wd[kh, 2]
        contrib = xc + xl + xr
        acc = contrib if acc is None else acc + contrib

    # Pointwise 1x1 conv == channel matmul on the MXU (bf16 operands, f32 accumulate).
    # Wp is padded to a multiple of 8 in the wrapper so this reshape is a layout no-op.
    y = jnp.dot(acc.reshape(TH * Wp, Cp).astype(jnp.bfloat16), wp_ref[...],
                preferred_element_type=jnp.float32)
    y = y * ss_ref[0] + ss_ref[1]          # BN scale kept in f32 (not folded into bf16 w)
    o_ref[...] = jnp.maximum(y, 0.0).reshape(TH, Wp, Coutp)


def _pw_kernel(x_ref, wp_ref, ss_ref, o_ref):
    """Pointwise-only path (sw=False): 1x1 conv -> BN -> ReLU."""
    TH, Wp, Cp = x_ref.shape
    Coutp = o_ref.shape[-1]
    y = jnp.dot(x_ref[...].reshape(TH * Wp, Cp), wp_ref[...],
                preferred_element_type=jnp.float32)
    y = y * ss_ref[0] + ss_ref[1]
    o_ref[...] = jnp.maximum(y, 0.0).reshape(TH, Wp, Coutp)


# ---------------------------------------------------------------------------
# Wrapper
# ---------------------------------------------------------------------------

def _round_up(x, m):
    return (x + m - 1) // m * m


def _pick_row_tile(H, Wp, Cp, Coutp, budget_bytes):
    """Largest divisor of H whose per-step working set fits the VMEM budget."""
    if H <= 32:
        return H                      # whole image per step for small spatial sizes
    best = 1
    for th in range(1, H + 1):
        if H % th:
            continue
        foot = th * Wp * (2 * 2 * Cp        # double-buffered bf16 input tile
                          + 4 * 4 * Cp      # f32 depthwise slabs / accumulator
                          + 2 * 4 * Coutp)  # double-buffered f32 output tile
        if foot <= budget_bytes:
            best = th
    return best


def depthwise_separable_conv(x_nchw, w_dw, w_pw, bn_gamma, bn_beta,
                             bn_mean, bn_var, *, stride=1, eps=1e-5, sw=True,
                             row_tile=None):
    """Forward pass matching DepthwiseSeparableConv.forward(x, sw) in eval mode.

    x_nchw : (N, C, H, W)      float32
    w_dw   : (C, 1, 3, 3)      depthwise conv weight (PyTorch layout)
    w_pw   : (Cout, C, 1, 1)   pointwise conv weight (PyTorch layout)
    bn_*   : (Cout,)           BatchNorm2d parameters / running stats
    returns (N, Cout, H, W)
    """
    assert stride == 1, "only stride=1 supported"
    # TODO(synk): stride>1 depthwise path not implemented (module default is stride=1).

    N, C, H, W = x_nchw.shape
    Cout = w_pw.shape[0]
    Cp = _round_up(C, 128)        # lane-dense channel padding
    Coutp = _round_up(Cout, 128)
    Wp = _round_up(W, 8)          # keeps the (TH*Wp, Cp) reshape a layout no-op

    # Generation-aware VMEM budget (64 MiB/TC on v7x, 128 MiB on v5e/v6e).
    try:
        vmem_cap = int(pltpu.get_tpu_info().vmem_capacity_bytes)
    except Exception:
        vmem_cap = 64 << 20
    vmem_limit = min((vmem_cap * 3) // 4, 96 << 20)

    if row_tile is None:
        TH = _pick_row_tile(H, Wp, Cp, Coutp, budget_bytes=vmem_limit // 6)
    else:
        assert H % row_tile == 0
        TH = row_tile
    nT = H // TH

    # Single layout pass over activations: NCHW -> NHWC, pad W/C, cast to bf16.
    x = jnp.transpose(x_nchw, (0, 2, 3, 1))
    x = jnp.pad(x, ((0, 0), (0, 0), (0, Wp - W), (0, Cp - C))).astype(jnp.bfloat16)

    # BN folded as (scale, shift); both applied in f32 in the kernel epilogue so the
    # bf16 pointwise weights stay unscaled (better accuracy than folding into bf16).
    scale = (bn_gamma / jnp.sqrt(bn_var + eps)).astype(jnp.float32)
    shift = (bn_beta - bn_mean * scale).astype(jnp.float32)
    ss = jnp.stack([jnp.pad(scale, (0, Coutp - Cout)),
                    jnp.pad(shift, (0, Coutp - Cout))], axis=0)        # (2, Coutp)

    wp = jnp.transpose(w_pw[:, :, 0, 0], (1, 0)).astype(jnp.float32)
    wp = jnp.pad(wp, ((0, Cp - C), (0, Coutp - Cout))).astype(jnp.bfloat16)

    grid = (N, nT)
    out_shape = jax.ShapeDtypeStruct((N, H, Wp, Coutp), jnp.float32)
    out_spec = pl.BlockSpec((None, TH, Wp, Coutp), lambda n, r: (n, r, 0, 0))
    cparams = pltpu.CompilerParams(
        dimension_semantics=("parallel", "parallel"),
        vmem_limit_bytes=int(vmem_limit))

    if sw:
        # Depthwise weights -> (3, 3, Cp); padded channels are zero.
        wd = jnp.transpose(w_dw[:, 0, :, :], (1, 2, 0)).astype(jnp.float32)
        wd = jnp.pad(wd, ((0, 0), (0, 0), (0, Cp - C)))

        # Tiny per-tile halo rows (2 rows/tile) instead of a materialized overlapping
        # copy of the whole activation tensor (zeros at the top/bottom image edge).
        zrow = jnp.zeros((N, 1, Wp, Cp), x.dtype)
        if nT == 1:
            top = zrow
            bot = zrow
        else:
            top = jnp.concatenate([zrow, x[:, TH - 1:H - 1:TH]], axis=1)   # (N, nT, Wp, Cp)
            bot = jnp.concatenate([x[:, TH:H:TH], zrow], axis=1)
        halo = jnp.stack([top, bot], axis=2)                               # (N, nT, 2, Wp, Cp)

        # TODO(synk): wd/wp/ss are grid-invariant; single-buffering them
        # (pipeline_mode=pl.Buffered(1)) would reclaim a little VMEM.
        out = pl.pallas_call(
            _dw_pw_kernel,
            out_shape=out_shape,
            grid_spec=pltpu.PrefetchScalarGridSpec(
                num_scalar_prefetch=0,
                grid=grid,
                in_specs=[
                    pl.BlockSpec((None, TH, Wp, Cp), lambda n, r: (n, r, 0, 0)),
                    pl.BlockSpec((None, None, 2, Wp, Cp), lambda n, r: (n, r, 0, 0, 0)),
                    pl.BlockSpec((3, 3, Cp), lambda n, r: (0, 0, 0)),
                    pl.BlockSpec((Cp, Coutp), lambda n, r: (0, 0)),
                    pl.BlockSpec((2, Coutp), lambda n, r: (0, 0)),
                ],
                out_specs=out_spec),
            compiler_params=cparams,
        )(x, halo, wd, wp, ss)
    else:
        # sw=False: skip the depthwise conv entirely (pointwise-only kernel, no halo).
        out = pl.pallas_call(
            _pw_kernel,
            out_shape=out_shape,
            grid_spec=pltpu.PrefetchScalarGridSpec(
                num_scalar_prefetch=0,
                grid=grid,
                in_specs=[
                    pl.BlockSpec((None, TH, Wp, Cp), lambda n, r: (n, r, 0, 0)),
                    pl.BlockSpec((Cp, Coutp), lambda n, r: (0, 0)),
                    pl.BlockSpec((2, Coutp), lambda n, r: (0, 0)),
                ],
                out_specs=out_spec),
            compiler_params=cparams,
        )(x, wp, ss)

    # NOTE: when chaining several DS blocks, keep the padded-NHWC output and skip this
    # slice + transpose; converted here only to match the PyTorch module's NCHW output.
    out = out[:, :, :W, :Cout]
    return jnp.transpose(out, (0, 3, 1, 2))


# ---------------------------------------------------------------------------
# Pure-JAX reference (fp32) mirroring the PyTorch forward in eval mode
# ---------------------------------------------------------------------------

def _reference(x_nchw, w_dw, w_pw, bn_gamma, bn_beta, bn_mean, bn_var,
               *, eps=1e-5, sw=True):
    y = x_nchw
    if sw:
        C = x_nchw.shape[1]
        y = lax.conv_general_dilated(
            y, w_dw, window_strides=(1, 1), padding=((1, 1), (1, 1)),
            feature_group_count=C,
            dimension_numbers=("NCHW", "OIHW", "NCHW"))
    y = lax.conv_general_dilated(
        y, w_pw, window_strides=(1, 1), padding=((0, 0), (0, 0)),
        dimension_numbers=("NCHW", "OIHW", "NCHW"))
    scale = bn_gamma / jnp.sqrt(bn_var + eps)
    shift = bn_beta - bn_mean * scale
    y = y * scale[None, :, None, None] + shift[None, :, None, None]
    return jnp.maximum(y, 0.0)


if __name__ == "__main__":
    def make_inputs(key, N, C, Cout, H, W):
        k_x, k_dw, k_pw, k_g, k_b = jax.random.split(key, 5)
        x = jax.random.normal(k_x, (N, C, H, W), jnp.float32)
        w_dw = jax.random.normal(k_dw, (C, 1, 3, 3), jnp.float32) * 0.3
        w_pw = jax.random.normal(k_pw, (Cout, C, 1, 1), jnp.float32) * 0.3
        g = 1.0 + 0.1 * jax.random.normal(k_g, (Cout,), jnp.float32)
        b = 0.1 * jax.random.normal(k_b, (Cout,), jnp.float32)
        mean = jnp.zeros((Cout,), jnp.float32)   # BatchNorm2d default running stats
        var = jnp.ones((Cout,), jnp.float32)
        return x, w_dw, w_pw, g, b, mean, var

    dsconv = jax.jit(depthwise_separable_conv,
                     static_argnames=("stride", "eps", "sw", "row_tile"))

    # --- Config matching the module at small shapes (N=2, C=4, Cout=8, 16x16) ---
    args = make_inputs(jax.random.PRNGKey(0), 2, 4, 8, 16, 16)

    out = jax.block_until_ready(dsconv(*args, stride=1, sw=True))
    ref = _reference(*args, sw=True)
    assert out.shape == (2, 8, 16, 16)
    # bf16 activations / MXU operands -> looser tolerance than pure fp32.
    assert jnp.allclose(out, ref, atol=5e-2, rtol=5e-2), \
        f"max abs err {jnp.max(jnp.abs(out - ref))}"

    out2 = jax.block_until_ready(dsconv(*args, stride=1, sw=False))
    ref2 = _reference(*args, sw=False)
    assert jnp.allclose(out2, ref2, atol=5e-2, rtol=5e-2), \
        f"max abs err {jnp.max(jnp.abs(out2 - ref2))}"

    # --- Multi row-tile path (nT > 1): exercises the tiny-halo H handling ---
    args3 = make_inputs(jax.random.PRNGKey(1), 1, 8, 16, 32, 16)
    out3 = jax.block_until_ready(dsconv(*args3, stride=1, sw=True, row_tile=8))
    ref3 = _reference(*args3, sw=True)
    assert jnp.allclose(out3, ref3, atol=5e-2, rtol=5e-2), \
        f"max abs err {jnp.max(jnp.abs(out3 - ref3))}"

    print("KERNEL_OK")
</pallas_src>

<mosaic_0001>
module attributes {stable_mosaic.version = 11 : i64} {
  func.func @_dw_pw_kernel(%arg0: i32, %arg1: i32, %arg2: memref<1x16x16x128xbf16, #tpu.memory_space<vmem>>, %arg3: memref<1x1x2x16x128xbf16, #tpu.memory_space<vmem>>, %arg4: memref<3x3x128xf32, #tpu.memory_space<vmem>>, %arg5: memref<128x128xbf16, #tpu.memory_space<vmem>>, %arg6: memref<2x128xf32, #tpu.memory_space<vmem>>, %arg7: memref<1x16x16x128xf32, #tpu.memory_space<vmem>>) attributes {dimension_semantics = [#tpu.dimension_semantics<parallel>, #tpu.dimension_semantics<parallel>], iteration_bounds = array<i64: 2, 1>, scalar_prefetch = 0 : i64, scratch_operands = 0 : i64, tpu.core_type = #tpu.core_type<tc>, window_params = [{transform_indices = @transform_0, window_bounds = array<i64: 1, 16, 16, 128>}, {transform_indices = @transform_1, window_bounds = array<i64: 1, 1, 2, 16, 128>}, {pipeline_mode = #tpu.pipeline_mode<synchronous>, transform_indices = @transform_2, window_bounds = array<i64: 3, 3, 128>}, {pipeline_mode = #tpu.pipeline_mode<synchronous>, transform_indices = @transform_3, window_bounds = array<i64: 128, 128>}, {pipeline_mode = #tpu.pipeline_mode<synchronous>, transform_indices = @transform_4, window_bounds = array<i64: 2, 128>}, {transform_indices = @transform_5, window_bounds = array<i64: 1, 16, 16, 128>}]} {
    %c0 = arith.constant 0 : index
    %c0_0 = arith.constant 0 : index
    %c0_1 = arith.constant 0 : index
    %c0_2 = arith.constant 0 : index
    %0 = vector.load %arg2[%c0, %c0_0, %c0_1, %c0_2] : memref<1x16x16x128xbf16, #tpu.memory_space<vmem>>, vector<1x16x16x128xbf16>
    %1 = vector.shape_cast %0 : vector<1x16x16x128xbf16> to vector<16x16x128xbf16>
    %c0_3 = arith.constant 0 : index
    %c0_4 = arith.constant 0 : index
    %c0_5 = arith.constant 0 : index
    %c0_6 = arith.constant 0 : index
    %c0_7 = arith.constant 0 : index
    %2 = vector.load %arg3[%c0_3, %c0_4, %c0_5, %c0_6, %c0_7] : memref<1x1x2x16x128xbf16, #tpu.memory_space<vmem>>, vector<1x1x2x16x128xbf16>
    %3 = vector.shape_cast %2 : vector<1x1x2x16x128xbf16> to vector<2x16x128xbf16>
    %c0_8 = arith.constant 0 : index
    %c0_9 = arith.constant 0 : index
    %c0_10 = arith.constant 0 : index
    %4 = vector.load %arg4[%c0_8, %c0_9, %c0_10] : memref<3x3x128xf32, #tpu.memory_space<vmem>>, vector<3x3x128xf32>
    %5 = tpu.iota {dimensions = array<i32: 1>} : vector<1x16x1xi32>
    %c0_i32 = arith.constant 0 : i32
    %6 = vector.broadcast %c0_i32 : i32 to vector<1x16x1xi32>
    %7 = arith.cmpi eq, %5, %6 : vector<1x16x1xi32>
    %c15_i32 = arith.constant 15 : i32
    %8 = vector.broadcast %c15_i32 : i32 to vector<1x16x1xi32>
    %9 = arith.cmpi eq, %5, %8 : vector<1x16x1xi32>
    %10 = vector.extract_strided_slice %3 {offsets = [0, 0, 0], sizes = [1, 16, 128], strides = [1, 1, 1]} : vector<2x16x128xbf16> to vector<1x16x128xbf16>
    %11 = vector.extract_strided_slice %1 {offsets = [0, 0, 0], sizes = [15, 16, 128], strides = [1, 1, 1]} : vector<16x16x128xbf16> to vector<15x16x128xbf16>
    %12 = tpu.concatenate %10, %11 in 0 : vector<1x16x128xbf16>, vector<15x16x128xbf16> -> vector<16x16x128xbf16>
    %13 = arith.extf %12 : vector<16x16x128xbf16> to vector<16x16x128xf32>
    %14 = vector.extract_strided_slice %4 {offsets = [0, 1, 0], sizes = [1, 1, 128], strides = [1, 1, 1]} : vector<3x3x128xf32> to vector<1x1x128xf32>
    %15 = vector.shape_cast %14 : vector<1x1x128xf32> to vector<128xf32>
    %16 = vector.shape_cast %15 : vector<128xf32> to vector<1x1x128xf32>
    %17 = vector.broadcast %16 : vector<1x1x128xf32> to vector<16x16x128xf32>
    %18 = arith.mulf %13, %17 : vector<16x16x128xf32>
    %c1_i32 = arith.constant 1 : i32
    %19 = tpu.dynamic_rotate %13 by %c1_i32 dim 1 : vector<16x16x128xf32>, i32 -> vector<16x16x128xf32>
    %cst = arith.constant 0.000000e+00 : f32
    %20 = vector.shape_cast %7 : vector<1x16x1xi1> to vector<1x16x1xi1>
    %21 = vector.broadcast %20 : vector<1x16x1xi1> to vector<16x16x128xi1>
    %22 = vector.broadcast %cst : f32 to vector<16x16x128xf32>
    %23 = arith.select %21, %22, %19 : vector<16x16x128xi1>, vector<16x16x128xf32>
    %24 = vector.extract_strided_slice %4 {offsets = [0, 0, 0], sizes = [1, 1, 128], strides = [1, 1, 1]} : vector<3x3x128xf32> to vector<1x1x128xf32>
    %25 = vector.shape_cast %24 : vector<1x1x128xf32> to vector<128xf32>
    %26 = vector.shape_cast %25 : vector<128xf32> to vector<1x1x128xf32>
    %27 = vector.broadcast %26 : vector<1x1x128xf32> to vector<16x16x128xf32>
    %28 = arith.mulf %23, %27 : vector<16x16x128xf32>
    %c15_i32_11 = arith.constant 15 : i32
    %29 = tpu.dynamic_rotate %13 by %c15_i32_11 dim 1 : vector<16x16x128xf32>, i32 -> vector<16x16x128xf32>
    %cst_12 = arith.constant 0.000000e+00 : f32
    %30 = vector.shape_cast %9 : vector<1x16x1xi1> to vector<1x16x1xi1>
    %31 = vector.broadcast %30 : vector<1x16x1xi1> to vector<16x16x128xi1>
    %32 = vector.broadcast %cst_12 : f32 to vector<16x16x128xf32>
    %33 = arith.select %31, %32, %29 : vector<16x16x128xi1>, vector<16x16x128xf32>
    %34 = vector.extract_strided_slice %4 {offsets = [0, 2, 0], sizes = [1, 1, 128], strides = [1, 1, 1]} : vector<3x3x128xf32> to vector<1x1x128xf32>
    %35 = vector.shape_cast %34 : vector<1x1x128xf32> to vector<128xf32>
    %36 = vector.shape_cast %35 : vector<128xf32> to vector<1x1x128xf32>
    %37 = vector.broadcast %36 : vector<1x1x128xf32> to vector<16x16x128xf32>
    %38 = arith.mulf %33, %37 : vector<16x16x128xf32>
    %39 = arith.addf %18, %28 : vector<16x16x128xf32>
    %40 = arith.addf %39, %38 : vector<16x16x128xf32>
    %41 = arith.extf %1 : vector<16x16x128xbf16> to vector<16x16x128xf32>
    %42 = vector.extract_strided_slice %4 {offsets = [1, 1, 0], sizes = [1, 1, 128], strides = [1, 1, 1]} : vector<3x3x128xf32> to vector<1x1x128xf32>
    %43 = vector.shape_cast %42 : vector<1x1x128xf32> to vector<128xf32>
    %44 = vector.shape_cast %43 : vector<128xf32> to vector<1x1x128xf32>
    %45 = vector.broadcast %44 : vector<1x1x128xf32> to vector<16x16x128xf32>
    %46 = arith.mulf %41, %45 : vector<16x16x128xf32>
    %c1_i32_13 = arith.constant 1 : i32
    %47 = tpu.dynamic_rotate %41 by %c1_i32_13 dim 1 : vector<16x16x128xf32>, i32 -> vector<16x16x128xf32>
    %cst_14 = arith.constant 0.000000e+00 : f32
    %48 = vector.shape_cast %7 : vector<1x16x1xi1> to vector<1x16x1xi1>
    %49 = vector.broadcast %48 : vector<1x16x1xi1> to vector<16x16x128xi1>
    %50 = vector.broadcast %cst_14 : f32 to vector<16x16x128xf32>
    %51 = arith.select %49, %50, %47 : vector<16x16x128xi1>, vector<16x16x128xf32>
    %52 = vector.extract_strided_slice %4 {offsets = [1, 0, 0], sizes = [1, 1, 128], strides = [1, 1, 1]} : vector<3x3x128xf32> to vector<1x1x128xf32>
    %53 = vector.shape_cast %52 : vector<1x1x128xf32> to vector<128xf32>
    %54 = vector.shape_cast %53 : vector<128xf32> to vector<1x1x128xf32>
    %55 = vector.broadcast %54 : vector<1x1x128xf32> to vector<16x16x128xf32>
    %56 = arith.mulf %51, %55 : vector<16x16x128xf32>
    %c15_i32_15 = arith.constant 15 : i32
    %57 = tpu.dynamic_rotate %41 by %c15_i32_15 dim 1 : vector<16x16x128xf32>, i32 -> vector<16x16x128xf32>
    %cst_16 = arith.constant 0.000000e+00 : f32
    %58 = vector.shape_cast %9 : vector<1x16x1xi1> to vector<1x16x1xi1>
    %59 = vector.broadcast %58 : vector<1x16x1xi1> to vector<16x16x128xi1>
    %60 = vector.broadcast %cst_16 : f32 to vector<16x16x128xf32>
    %61 = arith.select %59, %60, %57 : vector<16x16x128xi1>, vector<16x16x128xf32>
    %62 = vector.extract_strided_slice %4 {offsets = [1, 2, 0], sizes = [1, 1, 128], strides = [1, 1, 1]} : vector<3x3x128xf32> to vector<1x1x128xf32>
    %63 = vector.shape_cast %62 : vector<1x1x128xf32> to vector<128xf32>
    %64 = vector.shape_cast %63 : vector<128xf32> to vector<1x1x128xf32>
    %65 = vector.broadcast %64 : vector<1x1x128xf32> to vector<16x16x128xf32>
    %66 = arith.mulf %61, %65 : vector<16x16x128xf32>
    %67 = arith.addf %46, %56 : vector<16x16x128xf32>
    %68 = arith.addf %67, %66 : vector<16x16x128xf32>
    %69 = arith.addf %40, %68 : vector<16x16x128xf32>
    %70 = vector.extract_strided_slice %1 {offsets = [1, 0, 0], sizes = [15, 16, 128], strides = [1, 1, 1]} : vector<16x16x128xbf16> to vector<15x16x128xbf16>
    %71 = vector.extract_strided_slice %3 {offsets = [1, 0, 0], sizes = [1, 16, 128], strides = [1, 1, 1]} : vector<2x16x128xbf16> to vector<1x16x128xbf16>
    %72 = tpu.concatenate %70, %71 in 0 : vector<15x16x128xbf16>, vector<1x16x128xbf16> -> vector<16x16x128xbf16>
    %73 = arith.extf %72 : vector<16x16x128xbf16> to vector<16x16x128xf32>
    %74 = vector.extract_strided_slice %4 {offsets = [2, 1, 0], sizes = [1, 1, 128], strides = [1, 1, 1]} : vector<3x3x128xf32> to vector<1x1x128xf32>
    %75 = vector.shape_cast %74 : vector<1x1x128xf32> to vector<128xf32>
    %76 = vector.shape_cast %75 : vector<128xf32> to vector<1x1x128xf32>
    %77 = vector.broadcast %76 : vector<1x1x128xf32> to vector<16x16x128xf32>
    %78 = arith.mulf %73, %77 : vector<16x16x128xf32>
    %c1_i32_17 = arith.constant 1 : i32
    %79 = tpu.dynamic_rotate %73 by %c1_i32_17 dim 1 : vector<16x16x128xf32>, i32 -> vector<16x16x128xf32>
    %cst_18 = arith.constant 0.000000e+00 : f32
    %80 = vector.shape_cast %7 : vector<1x16x1xi1> to vector<1x16x1xi1>
    %81 = vector.broadcast %80 : vector<1x16x1xi1> to vector<16x16x128xi1>
    %82 = vector.broadcast %cst_18 : f32 to vector<16x16x128xf32>
    %83 = arith.select %81, %82, %79 : vector<16x16x128xi1>, vector<16x16x128xf32>
    %84 = vector.extract_strided_slice %4 {offsets = [2, 0, 0], sizes = [1, 1, 128], strides = [1, 1, 1]} : vector<3x3x128xf32> to vector<1x1x128xf32>
    %85 = vector.shape_cast %84 : vector<1x1x128xf32> to vector<128xf32>
    %86 = vector.shape_cast %85 : vector<128xf32> to vector<1x1x128xf32>
    %87 = vector.broadcast %86 : vector<1x1x128xf32> to vector<16x16x128xf32>
    %88 = arith.mulf %83, %87 : vector<16x16x128xf32>
    %c15_i32_19 = arith.constant 15 : i32
    %89 = tpu.dynamic_rotate %73 by %c15_i32_19 dim 1 : vector<16x16x128xf32>, i32 -> vector<16x16x128xf32>
    %cst_20 = arith.constant 0.000000e+00 : f32
    %90 = vector.shape_cast %9 : vector<1x16x1xi1> to vector<1x16x1xi1>
    %91 = vector.broadcast %90 : vector<1x16x1xi1> to vector<16x16x128xi1>
    %92 = vector.broadcast %cst_20 : f32 to vector<16x16x128xf32>
    %93 = arith.select %91, %92, %89 : vector<16x16x128xi1>, vector<16x16x128xf32>
    %94 = vector.extract_strided_slice %4 {offsets = [2, 2, 0], sizes = [1, 1, 128], strides = [1, 1, 1]} : vector<3x3x128xf32> to vector<1x1x128xf32>
    %95 = vector.shape_cast %94 : vector<1x1x128xf32> to vector<128xf32>
    %96 = vector.shape_cast %95 : vector<128xf32> to vector<1x1x128xf32>
    %97 = vector.broadcast %96 : vector<1x1x128xf32> to vector<16x16x128xf32>
    %98 = arith.mulf %93, %97 : vector<16x16x128xf32>
    %99 = arith.addf %78, %88 : vector<16x16x128xf32>
    %100 = arith.addf %99, %98 : vector<16x16x128xf32>
    %101 = arith.addf %69, %100 : vector<16x16x128xf32>
    %102 = vector.shape_cast %101 : vector<16x16x128xf32> to vector<256x128xf32>
    %103 = arith.truncf %102 : vector<256x128xf32> to vector<256x128xbf16>
    %c0_21 = arith.constant 0 : index
    %c0_22 = arith.constant 0 : index
    %104 = vector.load %arg5[%c0_21, %c0_22] : memref<128x128xbf16, #tpu.memory_space<vmem>>, vector<128x128xbf16>
    %cst_23 = arith.constant dense<0.000000e+00> : vector<256x128xf32>
    %105 = tpu.matmul %103, %104, %cst_23 {dimension_numbers = #tpu.dot_dimension_numbers<[1], [0], [0], [1], [0, 0, 1, 1], [], []>} : vector<256x128xbf16>, vector<128x128xbf16>, vector<256x128xf32> -> vector<256x128xf32>
    %c0_24 = arith.constant 0 : index
    %c0_25 = arith.constant 0 : index
    %106 = vector.load %arg6[%c0_24, %c0_25] : memref<2x128xf32, #tpu.memory_space<vmem>>, vector<1x128xf32>
    %107 = vector.shape_cast %106 : vector<1x128xf32> to vector<128xf32>
    %108 = vector.shape_cast %107 : vector<128xf32> to vector<1x128xf32>
    %109 = vector.broadcast %108 : vector<1x128xf32> to vector<256x128xf32>
    %110 = arith.mulf %105, %109 : vector<256x128xf32>
    %c1 = arith.constant 1 : index
    %c0_26 = arith.constant 0 : index
    %111 = vector.load %arg6[%c1, %c0_26] : memref<2x128xf32, #tpu.memory_space<vmem>>, vector<1x128xf32>
    %112 = vector.shape_cast %111 : vector<1x128xf32> to vector<128xf32>
    %113 = vector.shape_cast %112 : vector<128xf32> to vector<1x128xf32>
    %114 = vector.broadcast %113 : vector<1x128xf32> to vector<256x128xf32>
    %115 = arith.addf %110, %114 : vector<256x128xf32>
    %cst_27 = arith.constant 0.000000e+00 : f32
    %116 = vector.broadcast %cst_27 : f32 to vector<256x128xf32>
    %117 = arith.maximumf %115, %116 : vector<256x128xf32>
    %118 = vector.shape_cast %117 : vector<256x128xf32> to vector<16x16x128xf32>
    %c0_28 = arith.constant 0 : index
    %c0_29 = arith.constant 0 : index
    %c0_30 = arith.constant 0 : index
    %c0_31 = arith.constant 0 : index
    %119 = vector.load %arg7[%c0_28, %c0_29, %c0_30, %c0_31] : memref<1x16x16x128xf32, #tpu.memory_space<vmem>>, vector<1x16x16x128xf32>
    %120 = vector.shape_cast %119 : vector<1x16x16x128xf32> to vector<16x16x128xf32>
    %121 = vector.shape_cast %118 : vector<16x16x128xf32> to vector<1x16x16x128xf32>
    tpu.vector_store %arg7[%c0_28, %c0_29, %c0_30, %c0_31], %121 {strides = array<i32>} : memref<1x16x16x128xf32, #tpu.memory_space<vmem>>, vector<1x16x16x128xf32>,
    return
  }
  func.func @transform_0(%arg0: i32, %arg1: i32) -> (i32, i32, i32, i32) {
    %c0_i32 = arith.constant 0 : i32
    %c0_i32_0 = arith.constant 0 : i32
    %c0_i32_1 = arith.constant 0 : i32
    return %arg0, %arg1, %c0_i32, %c0_i32_0 : i32, i32, i32, i32
  }
  func.func @transform_1(%arg0: i32, %arg1: i32) -> (i32, i32, i32, i32, i32) {
    %c0_i32 = arith.constant 0 : i32
    %c0_i32_0 = arith.constant 0 : i32
    %c0_i32_1 = arith.constant 0 : i32
    %c0_i32_2 = arith.constant 0 : i32
    return %arg0, %arg1, %c0_i32, %c0_i32_0, %c0_i32_1 : i32, i32, i32, i32, i32
  }
  func.func @transform_2(%arg0: i32, %arg1: i32) -> (i32, i32, i32) {
    %c0_i32 = arith.constant 0 : i32
    %c0_i32_0 = arith.constant 0 : i32
    %c0_i32_1 = arith.constant 0 : i32
    %c0_i32_2 = arith.constant 0 : i32
    return %c0_i32, %c0_i32_0, %c0_i32_1 : i32, i32, i32
  }
  func.func @transform_3(%arg0: i32, %arg1: i32) -> (i32, i32) {
    %c0_i32 = arith.constant 0 : i32
    %c0_i32_0 = arith.constant 0 : i32
    %c0_i32_1 = arith.constant 0 : i32
    return %c0_i32, %c0_i32_0 : i32, i32
  }
  func.func @transform_4(%arg0: i32, %arg1: i32) -> (i32, i32) {
    %c0_i32 = arith.constant 0 : i32
    %c0_i32_0 = arith.constant 0 : i32
    %c0_i32_1 = arith.constant 0 : i32
    return %c0_i32, %c0_i32_0 : i32, i32
  }
  func.func @transform_5(%arg0: i32, %arg1: i32) -> (i32, i32, i32, i32) {
    %c0_i32 = arith.constant 0 : i32
    %c0_i32_0 = arith.constant 0 : i32
    %c0_i32_1 = arith.constant 0 : i32
    return %arg0, %arg1, %c0_i32, %c0_i32_0 : i32, i32, i32, i32
  }
}

</mosaic_0001>

<llo_original>
// kernel: depthwise_separable_conv.1
$region0: #{depthwise_separable_conv.1}
  #allocation0 [shape = 'u32[]', space=smem, size = 0x4, offset = 0x4, fixed_abs, tag = 'smem constant byte address 0x4 - core index']
  #allocation1 [shape = 'u32[72,128]{1,0:T(1,128)}', space=vmem, size = 0x9000, scoped, tag = 'internal scratch']
  %s0 = inlined_call_operand.vmem [shape: bf16[2,16,16,128], index: 0, kind: input, shape index: {}]
  %s1 = inlined_call_operand.vmem [shape: bf16[2,1,2,16,128], index: 1, kind: input, shape index: {}]
  %s2 = inlined_call_operand.vmem [shape: f32[3,3,128], index: 2, kind: input, shape index: {}]
  %s3 = inlined_call_operand.vmem [shape: bf16[128,128], index: 3, kind: input, shape index: {}]
  %s4 = inlined_call_operand.vmem [shape: f32[2,128], index: 4, kind: input, shape index: {}]
  %s5 = inlined_call_operand.vmem [shape: f32[2,16,16,128], index: 5, kind: output, shape index: {}]
  %s6 = sld [smem:[#allocation0]]
  $region53: #{depthwise_separable_conv.1} parent=0
    _
  %s8 = ssub.s32 1, %s6
  %s9 = scalar_select 0, %s8, %s6
  loop: start=0, step=1, limit=4
  $region2: #{depthwise_separable_conv.1} parent=0 // loop_pre_header
    _
  $region3: #{depthwise_separable_conv.1} parent=0 // loop_header
    %s11 = sphi 0, %s15
    %p12 = scmp.ge.s32.totalorder %s11, 4
    %s18 = sphi 0, %s30
    %s19 = sphi 0, %s26
    %s20 = sphi 0, %s18
    %s21 = sphi 0, %s19
    %s22 = sphi 0, %s20
    %s23 = sphi 0, %s21
    %s35 = sphi 0, %s37
    %s38 = sphi 0, %s35
    %s39 = sphi 0, %s38
    %s55 = sphi 0, %s39
    %s63 = sphi 0, %s65
    %s66 = sphi 0, %s63
    %s67 = sphi 0, %s66
    %s83 = sphi 0, %s67
    %s87 = sphi 0, %s87
    %s89 = sphi 0, %s87
    %s90 = sphi 0, %s89
    %s104 = sphi 0, %s90
    %s108 = sphi 0, %s108
    %s110 = sphi 0, %s108
    %s111 = sphi 0, %s110
    %s125 = sphi 0, %s111
    %s129 = sphi 0, %s129
    %s131 = sphi 0, %s129
    %s132 = sphi 0, %s131
    %s146 = sphi 0, %s132
    %s154 = sphi 0, %s156
    %s157 = sphi 0, %s154
    %s158 = sphi 0, %s157
    %s174 = sphi 0, %s158
  $region4: #{depthwise_separable_conv.1} parent=0 // loop_header_branch
    %14 = sbr.rel (%p12) target = $region8
  $region5: #{depthwise_separable_conv.1} parent=0 // loop_body
    %s16 = ssub.s32 %s11, 1
    %s17 = ssub.s32 %s11, 2
    %s24 = sadd.s32 1, %s19
    %p25 = scmp.ge.s32.totalorder %s24, 1
    %s26 = scalar_select %p25, 0, %s24
    %s27 = sadd.s32 1, %s18
    %s28 = scalar_select %p25, %s27, %s18
    %p29 = scmp.ge.s32.totalorder %s28, 2
    %s30 = scalar_select %p29, 0, %s28
    %s31 = ssub.s32 %s18, %s30
    %s32 = ssub.s32 %s19, %s26
    %s33 = sor.u32 %s31, %s32
    %p34 = scmp.eq.s32.totalorder %s33, 0
    %s36 = sadd.s32 %s35, 1
    %s37 = scalar_select %p34, %s35, %s36
    %p40 = pneg %p34
    %p41 = scmp.eq.s32.totalorder %s11, 1
    %p42 = por %p40, %p41
    %p43 = scmp.ne.s32.totalorder %s35, %s38
    %p44 = scmp.eq.s32.totalorder %s11, 0
    %p45 = por %p43, %p44
    %p46 = scmp.ne.s32.totalorder %s35, %s38
    %p47 = scmp.eq.s32.totalorder %s16, 1
    %p48 = por %p46, %p47
    %p49 = scmp.ne.s32.totalorder %s38, %s39
    %p50 = scmp.eq.s32.totalorder %s16, 0
    %p51 = por %p49, %p50
    %p52 = scmp.ne.s32.totalorder %s38, %s39
    %p53 = scmp.eq.s32.totalorder %s17, 1
    %p54 = por %p52, %p53
    %p56 = scmp.ne.s32.totalorder %s39, %s55
    %p57 = scmp.eq.s32.totalorder %s17, 0
    %p58 = por %p56, %p57
    %s59 = ssub.s32 %s18, %s30
    %s60 = ssub.s32 %s19, %s26
    %s61 = sor.u32 %s59, %s60
    %p62 = scmp.eq.s32.totalorder %s61, 0
    %s64 = sadd.s32 %s63, 1
    %s65 = scalar_select %p62, %s63, %s64
    %p68 = pneg %p62
    %p69 = scmp.eq.s32.totalorder %s11, 1
    %p70 = por %p68, %p69
    %p71 = scmp.ne.s32.totalorder %s63, %s66
    %p72 = scmp.eq.s32.totalorder %s11, 0
    %p73 = por %p71, %p72
    %p74 = scmp.ne.s32.totalorder %s63, %s66
    %p75 = scmp.eq.s32.totalorder %s16, 1
    %p76 = por %p74, %p75
    %p77 = scmp.ne.s32.totalorder %s66, %s67
    %p78 = scmp.eq.s32.totalorder %s16, 0
    %p79 = por %p77, %p78
    %p80 = scmp.ne.s32.totalorder %s66, %s67
    %p81 = scmp.eq.s32.totalorder %s17, 1
    %p82 = por %p80, %p81
    %p84 = scmp.ne.s32.totalorder %s67, %s83
    %p85 = scmp.eq.s32.totalorder %s17, 0
    %p86 = por %p84, %p85
    %s88 = sadd.s32 %s87, 1
    %p91 = scmp.eq.s32.totalorder %s11, 1
    %p92 = scmp.ne.s32.totalorder %s87, %s89
    %p93 = scmp.eq.s32.totalorder %s11, 0
    %p94 = por %p92, %p93
    %p95 = scmp.ne.s32.totalorder %s87, %s89
    %p96 = scmp.eq.s32.totalorder %s16, 1
    %p97 = por %p95, %p96
    %p98 = scmp.ne.s32.totalorder %s89, %s90
    %p99 = scmp.eq.s32.totalorder %s16, 0
    %p100 = por %p98, %p99
    %p101 = scmp.ne.s32.totalorder %s89, %s90
    %p102 = scmp.eq.s32.totalorder %s17, 1
    %p103 = por %p101, %p102
    %p105 = scmp.ne.s32.totalorder %s90, %s104
    %p106 = scmp.eq.s32.totalorder %s17, 0
    %p107 = por %p105, %p106
    %s109 = sadd.s32 %s108, 1
    %p112 = scmp.eq.s32.totalorder %s11, 1
    %p113 = scmp.ne.s32.totalorder %s108, %s110
    %p114 = scmp.eq.s32.totalorder %s11, 0
    %p115 = por %p113, %p114
    %p116 = scmp.ne.s32.totalorder %s108, %s110
    %p117 = scmp.eq.s32.totalorder %s16, 1
    %p118 = por %p116, %p117
    %p119 = scmp.ne.s32.totalorder %s110, %s111
    %p120 = scmp.eq.s32.totalorder %s16, 0
    %p121 = por %p119, %p120
    %p122 = scmp.ne.s32.totalorder %s110, %s111
    %p123 = scmp.eq.s32.totalorder %s17, 1
    %p124 = por %p122, %p123
    %p126 = scmp.ne.s32.totalorder %s111, %s125
    %p127 = scmp.eq.s32.totalorder %s17, 0
    %p128 = por %p126, %p127
    %s130 = sadd.s32 %s129, 1
    %p133 = scmp.eq.s32.totalorder %s11, 1
    %p134 = scmp.ne.s32.totalorder %s129, %s131
    %p135 = scmp.eq.s32.totalorder %s11, 0
    %p136 = por %p134, %p135
    %p137 = scmp.ne.s32.totalorder %s129, %s131
    %p138 = scmp.eq.s32.totalorder %s16, 1
    %p139 = por %p137, %p138
    %p140 = scmp.ne.s32.totalorder %s131, %s132
    %p141 = scmp.eq.s32.totalorder %s16, 0
    %p142 = por %p140, %p141
    %p143 = scmp.ne.s32.totalorder %s131, %s132
    %p144 = scmp.eq.s32.totalorder %s17, 1
    %p145 = por %p143, %p144
    %p147 = scmp.ne.s32.totalorder %s132, %s146
    %p148 = scmp.eq.s32.totalorder %s17, 0
    %p149 = por %p147, %p148
    %s150 = ssub.s32 %s18, %s30
    %s151 = ssub.s32 %s19, %s26
    %s152 = sor.u32 %s150, %s151
    %p153 = scmp.eq.s32.totalorder %s152, 0
    %s155 = sadd.s32 %s154, 1
    %s156 = scalar_select %p153, %s154, %s155
    %p159 = pneg %p153
    %p160 = scmp.eq.s32.totalorder %s11, 1
    %p161 = por %p159, %p160
    %p162 = scmp.ne.s32.totalorder %s154, %s157
    %p163 = scmp.eq.s32.totalorder %s11, 0
    %p164 = por %p162, %p163
    %p165 = scmp.ne.s32.totalorder %s154, %s157
    %p166 = scmp.eq.s32.totalorder %s16, 1
    %p167 = por %p165, %p166
    %p168 = scmp.ne.s32.totalorder %s157, %s158
    %p169 = scmp.eq.s32.totalorder %s16, 0
    %p170 = por %p168, %p169
    %p171 = scmp.ne.s32.totalorder %s157, %s158
    %p172 = scmp.eq.s32.totalorder %s17, 1
    %p173 = por %p171, %p172
    %p175 = scmp.ne.s32.totalorder %s158, %s174
    %p176 = scmp.eq.s32.totalorder %s17, 0
    %p177 = por %p175, %p176
    %p178 = scmp.le.s32.totalorder 1, %s11
    %p179 = scmp.lt.s32.totalorder %s11, 3
    %p180 = pnand %p178, %p179
    %p181 = pneg %p180
    // Predicated region
    $region9: #{depthwise_separable_conv.1} parent=5 // pred_check
      _
    $region10: #{depthwise_separable_conv.1} parent=5 // pred_check_branch
      %183 = sbr.rel (%p180) target = $region12
    $region11: #{depthwise_separable_conv.1} parent=5 // pred_region
      %s184 = ssub.s32 %s11, 1
      // Predicated region
      $region13: #{depthwise_separable_conv.1} parent=11 // pred_check
        %p185 = pneg %p100
      $region14: #{depthwise_separable_conv.1} parent=11 // pred_check_branch
        %187 = sbr.rel (%p185) target = $region16
      $region15: #{depthwise_separable_conv.1} parent=11 // pred_region
        _
      $region16: #{depthwise_separable_conv.1} parent=11 // pred_fallthru
        _
      // Predicated region
      $region17: #{depthwise_separable_conv.1} parent=11 // pred_check
        %p188 = pneg %p121
      $region18: #{depthwise_separable_conv.1} parent=11 // pred_check_branch
        %190 = sbr.rel (%p188) target = $region20
      $region19: #{depthwise_separable_conv.1} parent=11 // pred_region
        _
      $region20: #{depthwise_separable_conv.1} parent=11 // pred_fallthru
        _
      // Predicated region
      $region21: #{depthwise_separable_conv.1} parent=11 // pred_check
        %p191 = pneg %p142
      $region22: #{depthwise_separable_conv.1} parent=11 // pred_check_branch
        %193 = sbr.rel (%p191) target = $region24
      $region23: #{depthwise_separable_conv.1} parent=11 // pred_region
        _
      $region24: #{depthwise_separable_conv.1} parent=11 // pred_fallthru
        _
    $region12: #{depthwise_separable_conv.1} parent=5 // pred_fallthru
      _
    %p194 = scmp.lt.s32.totalorder %s11, 2
    // Predicated region
    $region25: #{depthwise_separable_conv.1} parent=5 // pred_check
      %p195 = pneg %p194
    $region26: #{depthwise_separable_conv.1} parent=5 // pred_check_branch
      %197 = sbr.rel (%p195) target = $region28
    $region27: #{depthwise_separable_conv.1} parent=5 // pred_region
      // Predicated region
      $region29: #{depthwise_separable_conv.1} parent=27 // pred_check
        %p198 = pneg %p45
      $region30: #{depthwise_separable_conv.1} parent=27 // pred_check_branch
        %200 = sbr.rel (%p198) target = $region32
      $region31: #{depthwise_separable_conv.1} parent=27 // pred_region
        %s201 = smul.u32 16, %s19
        %p202 = scmp.lt.s32.totalorder %s18, 1
        %s203 = scalar_select %p202, %s18, 1
        %p204 = scmp.lt.s32.totalorder %s201, 15
        %s205 = scalar_select %p204, %s201, 15
        %s206 = smul.addr %s205, 2
        %s207 = smul.addr %s203, 32
        %s208 = sadd.s32 %s206, %s207
        %s209 = smul.addr %s208, 4
        %s210 = scalar_lea.vmem %s0, %s209
        %s211 = smul.u32 16, %s19
      $region32: #{depthwise_separable_conv.1} parent=27 // pred_fallthru
        _
      // Predicated region
      $region33: #{depthwise_separable_conv.1} parent=27 // pred_check
        %p212 = pneg %p73
      $region34: #{depthwise_separable_conv.1} parent=27 // pred_check_branch
        %214 = sbr.rel (%p212) target = $region36
      $region35: #{depthwise_separable_conv.1} parent=27 // pred_region
        %p215 = scmp.lt.s32.totalorder %s18, 1
        %s216 = scalar_select %p215, %s18, 1
        %p217 = scmp.lt.s32.totalorder %s19, 0
        %s218 = scalar_select %p217, %s19, 0
        %s219 = smul.addr %s218, 4
        %s220 = smul.addr %s216, 4
        %s221 = sadd.s32 %s219, %s220
        %s222 = smul.addr %s221, 4
        %s223 = scalar_lea.vmem %s1, %s222
      $region36: #{depthwise_separable_conv.1} parent=27 // pred_fallthru
        _
    $region28: #{depthwise_separable_conv.1} parent=5 // pred_fallthru
      _
    %p224 = scmp.le.s32.totalorder 1, %s11
    %p225 = scmp.lt.s32.totalorder %s11, 3
    %p226 = pnand %p224, %p225
    %p227 = pneg %p226
    // Predicated region
    $region37: #{depthwise_separable_conv.1} parent=5 // pred_check
      _
    $region38: #{depthwise_separable_conv.1} parent=5 // pred_check_branch
      %229 = sbr.rel (%p226) target = $region40
    $region39: #{depthwise_separable_conv.1} parent=5 // pred_region
      %s230 = ssub.s32 %s11, 1
      %s231 = smul.u32 16, %s21
      %p232 = scmp.lt.s32.totalorder %s20, 1
      %s233 = scalar_select %p232, %s20, 1
      %p234 = scmp.lt.s32.totalorder %s231, 15
      %s235 = scalar_select %p234, %s231, 15
      %s236 = smul.addr %s235, 2
      %s237 = smul.addr %s233, 32
      %s238 = sadd.s32 %s236, %s237
      %s239 = smul.addr %s238, 4
      %s240 = scalar_lea.vmem %s0, %s239
      %p241 = pneg %p51
      %p242 = pneg %p48
      %p243 = scmp.lt.s32.totalorder %s20, 1
      %s244 = scalar_select %p243, %s20, 1
      %p245 = scmp.lt.s32.totalorder %s21, 0
      %s246 = scalar_select %p245, %s21, 0
      %s247 = smul.addr %s246, 4
      %s248 = smul.addr %s244, 4
      %s249 = sadd.s32 %s247, %s248
      %s250 = smul.addr %s249, 4
      %s251 = scalar_lea.vmem %s1, %s250
      %p252 = pneg %p79
      %p253 = pneg %p76
      %p254 = pneg %p100
      %p255 = pneg %p97
      %p256 = pneg %p121
      %p257 = pneg %p118
      %p258 = pneg %p142
      %p259 = pneg %p139
      %p260 = pneg %p170
      %p261 = pneg %p167
      %s262 = smul.u32 16, %s21
      %p263 = scmp.lt.s32.totalorder %s20, 1
      %s264 = scalar_select %p263, %s20, 1
      %p265 = scmp.lt.s32.totalorder %s262, 15
      %s266 = scalar_select %p265, %s262, 15
      %s267 = smul.addr %s266, 2
      %s268 = smul.addr %s264, 32
      %s269 = sadd.s32 %s267, %s268
      %s270 = smul.addr %s269, 8
      %s271 = scalar_lea.vmem %s5, %s270
      %s272 = smul.u32 16, %s21
      %p273 = scmp.lt.s32.totalorder %s20, 1
      %s274 = scalar_select %p273, %s20, 1
      %p275 = scmp.lt.s32.totalorder %s272, 15
      %s276 = scalar_select %p275, %s272, 15
      %s277 = smul.addr %s276, 2
      %s278 = smul.addr %s274, 32
      %s279 = sadd.s32 %s277, %s278
      %s280 = smul.addr %s279, 4
      %s281 = scalar_lea.vmem %s0, %s280
      %s282 = smul.u32 16, %s21
      %p283 = scmp.lt.s32.totalorder %s20, 1
      %s284 = scalar_select %p283, %s20, 1
      %p285 = scmp.lt.s32.totalorder %s21, 0
      %s286 = scalar_select %p285, %s21, 0
      %s287 = smul.addr %s286, 4
      %s288 = smul.addr %s284, 4
      %s289 = sadd.s32 %s287, %s288
      %s290 = smul.addr %s289, 4
      %s291 = scalar_lea.vmem %s1, %s290
      %s292 = smul.u32 16, %s21
      %p293 = scmp.lt.s32.totalorder %s20, 1
      %s294 = scalar_select %p293, %s20, 1
      %p295 = scmp.lt.s32.totalorder %s292, 15
      %s296 = scalar_select %p295, %s292, 15
      %s297 = smul.addr %s296, 2
      %s298 = smul.addr %s294, 32
      %s299 = sadd.s32 %s297, %s298
      %s300 = smul.addr %s299, 8
      %s301 = scalar_lea.vmem %s5, %s300
      %s302 = smul.u32 16, %s21
      %v303 = vld [vmem:[%s281] sm:$0xf]
      %v304 = vld [vmem:[%s281 + $0x4] sm:$0xf]
      %v305 = vld [vmem:[%s281 + $0x8] sm:$0xf]
      %v306 = vld [vmem:[%s281 + $0xc] sm:$0xf]
      %v307 = vld [vmem:[%s281 + $0x10] sm:$0xf]
      %v308 = vld [vmem:[%s281 + $0x14] sm:$0xf]
      %v309 = vld [vmem:[%s281 + $0x18] sm:$0xf]
      %v310 = vld [vmem:[%s281 + $0x1c] sm:$0xf]
      %v311 = vld [vmem:[%s281 + $0x20] sm:$0xf]
      %v312 = vld [vmem:[%s281 + $0x24] sm:$0xf]
      %v313 = vld [vmem:[%s281 + $0x28] sm:$0xf]
      %v314 = vld [vmem:[%s281 + $0x2c] sm:$0xf]
      %v315 = vld [vmem:[%s281 + $0x30] sm:$0xf]
      %v316 = vld [vmem:[%s281 + $0x34] sm:$0xf]
      %v317 = vld [vmem:[%s281 + $0x38] sm:$0xf]
      %v318 = vld [vmem:[%s281 + $0x3c] sm:$0xf]
      %v319 = vld [vmem:[%s281 + $0x40] sm:$0xf]
      %v320 = vld [vmem:[%s281 + $0x44] sm:$0xf]
      %v321 = vld [vmem:[%s281 + $0x48] sm:$0xf]
      %v322 = vld [vmem:[%s281 + $0x4c] sm:$0xf]
      %v323 = vld [vmem:[%s281 + $0x50] sm:$0xf]
      %v324 = vld [vmem:[%s281 + $0x54] sm:$0xf]
      %v325 = vld [vmem:[%s281 + $0x58] sm:$0xf]
      %v326 = vld [vmem:[%s281 + $0x5c] sm:$0xf]
      %v327 = vld [vmem:[%s281 + $0x60] sm:$0xf]
      %v328 = vld [vmem:[%s281 + $0x64] sm:$0xf]
      %v329 = vld [vmem:[%s281 + $0x68] sm:$0xf]
      %v330 = vld [vmem:[%s281 + $0x6c] sm:$0xf]
      %v331 = vld [vmem:[%s281 + $0x70] sm:$0xf]
      %v332 = vld [vmem:[%s281 + $0x74] sm:$0xf]
      %v333 = vld [vmem:[%s281 + $0x78] sm:$0xf]
      %v334 = vld [vmem:[%s281 + $0x7c] sm:$0xf]
      %v335 = vld [vmem:[%s291] sm:$0xf]
      %v336 = vld [vmem:[%s291 + $0x4] sm:$0xf]
      %v337 = vld [vmem:[%s291 + $0x8] sm:$0xf]
      %v338 = vld [vmem:[%s291 + $0xc] sm:$0xf]
      %v339 = vld [vmem:[%s2] sm:$0x7]
      %v340 = vld [vmem:[%s2 + $0x4] sm:$0x7]
      %v341 = vld [vmem:[%s2 + $0x8] sm:$0x7]
      %v342 = vlaneseq
      %v343 = vshrl.u32 %v342, 7
      %v344 = vadd.s32 %v343, 8
      %vm345 = vcmp.eq.s32.totalorder %v343, 0
      %vm346 = vcmp.eq.s32.totalorder %v344, 0
      %vm347 = vcmp.eq.s32.totalorder %v343, 15
      %vm348 = vcmp.eq.s32.totalorder %v344, 15
      %v349 = vunpack.c.l.bf16 %v335
      %v350 = vunpack.c.l.bf16 %v336
      %v351 = vunpack.c.l.bf16 %v303
      %v352 = vunpack.c.l.bf16 %v304
      %v353 = vunpack.c.l.bf16 %v305
      %v354 = vunpack.c.l.bf16 %v306
      %v355 = vunpack.c.l.bf16 %v307
      %v356 = vunpack.c.l.bf16 %v308
      %v357 = vunpack.c.l.bf16 %v309
      %v358 = vunpack.c.l.bf16 %v310
      %v359 = vunpack.c.l.bf16 %v311
      %v360 = vunpack.c.l.bf16 %v312
      %v361 = vunpack.c.l.bf16 %v313
      %v362 = vunpack.c.l.bf16 %v314
      %v363 = vunpack.c.l.bf16 %v315
      %v364 = vunpack.c.l.bf16 %v316
      %v365 = vunpack.c.l.bf16 %v317
      %v366 = vunpack.c.l.bf16 %v318
      %v367 = vunpack.c.l.bf16 %v319
      %v368 = vunpack.c.l.bf16 %v320
      %v369 = vunpack.c.l.bf16 %v321
      %v370 = vunpack.c.l.bf16 %v322
      %v371 = vunpack.c.l.bf16 %v323
      %v372 = vunpack.c.l.bf16 %v324
      %v373 = vunpack.c.l.bf16 %v325
      %v374 = vunpack.c.l.bf16 %v326
      %v375 = vunpack.c.l.bf16 %v327
      %v376 = vunpack.c.l.bf16 %v328
      %v377 = vunpack.c.l.bf16 %v329
      %v378 = vunpack.c.l.bf16 %v330
      %v379 = vunpack.c.l.bf16 %v331
      %v380 = vunpack.c.l.bf16 %v332
      %v381 = vperm.slane %v339, 1
      %v382 = vmul.f32 %v349, %v381
      %v383 = vmul.f32 %v350, %v381
      %v384 = vmul.f32 %v351, %v381
      %v385 = vmul.f32 %v352, %v381
      %v386 = vmul.f32 %v353, %v381
      %v387 = vmul.f32 %v354, %v381
      %v388 = vmul.f32 %v355, %v381
      %v389 = vmul.f32 %v356, %v381
      %v390 = vmul.f32 %v357, %v381
      %v391 = vmul.f32 %v358, %v381
      %v392 = vmul.f32 %v359, %v381
      %v393 = vmul.f32 %v360, %v381
      %v394 = vmul.f32 %v361, %v381
      %v395 = vmul.f32 %v362, %v381
      %v396 = vmul.f32 %v363, %v381
      %v397 = vmul.f32 %v364, %v381
      %v398 = vmul.f32 %v365, %v381
      %v399 = vmul.f32 %v366, %v381
      %v400 = vmul.f32 %v367, %v381
      %v401 = vmul.f32 %v368, %v381
      %v402 = vmul.f32 %v369, %v381
      %v403 = vmul.f32 %v370, %v381
      %v404 = vmul.f32 %v371, %v381
      %v405 = vmul.f32 %v372, %v381
      %v406 = vmul.f32 %v373, %v381
      %v407 = vmul.f32 %v374, %v381
      %v408 = vmul.f32 %v375, %v381
      %v409 = vmul.f32 %v376, %v381
      %v410 = vmul.f32 %v377, %v381
      %v411 = vmul.f32 %v378, %v381
      %v412 = vmul.f32 %v379, %v381
      %v413 = vmul.f32 %v380, %v381
      %v414 = vrot.slane %v349, 7
      %v415 = vrot.slane %v351, 7
      %v416 = vrot.slane %v353, 7
      %v417 = vrot.slane %v355, 7
      %v418 = vrot.slane %v357, 7
      %v419 = vrot.slane %v359, 7
      %v420 = vrot.slane %v361, 7
      %v421 = vrot.slane %v363, 7
      %v422 = vrot.slane %v365, 7
      %v423 = vrot.slane %v367, 7
      %v424 = vrot.slane %v369, 7
      %v425 = vrot.slane %v371, 7
      %v426 = vrot.slane %v373, 7
      %v427 = vrot.slane %v375, 7
      %v428 = vrot.slane %v377, 7
      %v429 = vrot.slane %v379, 7
      %v430 = vrot.slane %v350, 7
      %v431 = vrot.slane %v352, 7
      %v432 = vrot.slane %v354, 7
      %v433 = vrot.slane %v356, 7
      %v434 = vrot.slane %v358, 7
      %v435 = vrot.slane %v360, 7
      %v436 = vrot.slane %v362, 7
      %v437 = vrot.slane %v364, 7
      %v438 = vrot.slane %v366, 7
      %v439 = vrot.slane %v368, 7
      %v440 = vrot.slane %v370, 7
      %v441 = vrot.slane %v372, 7
      %v442 = vrot.slane %v374, 7
      %v443 = vrot.slane %v376, 7
      %v444 = vrot.slane %v378, 7
      %v445 = vrot.slane %v380, 7
      %vm446 = vcmp.lt.s32.totalorder %v343, 1
      %v447 = vsel %vm446, %v414, %v430
      %v448 = vsel %vm446, %v415, %v431
      %v449 = vsel %vm446, %v416, %v432
      %v450 = vsel %vm446, %v417, %v433
      %v451 = vsel %vm446, %v418, %v434
      %v452 = vsel %vm446, %v419, %v435
      %v453 = vsel %vm446, %v420, %v436
      %v454 = vsel %vm446, %v421, %v437
      %v455 = vsel %vm446, %v422, %v438
      %v456 = vsel %vm446, %v423, %v439
      %v457 = vsel %vm446, %v424, %v440
      %v458 = vsel %vm446, %v425, %v441
      %v459 = vsel %vm446, %v426, %v442
      %v460 = vsel %vm446, %v427, %v443
      %v461 = vsel %vm446, %v428, %v444
      %v462 = vsel %vm446, %v429, %v445
      %v463 = vsel %vm446, %v430, %v414
      %v464 = vsel %vm446, %v431, %v415
      %v465 = vsel %vm446, %v432, %v416
      %v466 = vsel %vm446, %v433, %v417
      %v467 = vsel %vm446, %v434, %v418
      %v468 = vsel %vm446, %v435, %v419
      %v469 = vsel %vm446, %v436, %v420
      %v470 = vsel %vm446, %v437, %v421
      %v471 = vsel %vm446, %v438, %v422
      %v472 = vsel %vm446, %v439, %v423
      %v473 = vsel %vm446, %v440, %v424
      %v474 = vsel %vm446, %v441, %v425
      %v475 = vsel %vm446, %v442, %v426
      %v476 = vsel %vm446, %v443, %v427
      %v477 = vsel %vm446, %v444, %v428
      %v478 = vsel %vm446, %v445, %v429
      %v479 = vsel %vm345, 1, 0
      %v480 = vsel %vm346, 1, 0
      %vm481 = vcmp.eq.s32.totalorder %v479, 1
      %vm482 = vcmp.eq.s32.totalorder %v480, 1
      %v483 = vsel %vm481, 0.0, %v463
      %v484 = vsel %vm482, 0.0, %v447
      %v485 = vsel %vm481, 0.0, %v464
      %v486 = vsel %vm482, 0.0, %v448
      %v487 = vsel %vm481, 0.0, %v465
      %v488 = vsel %vm482, 0.0, %v449
      %v489 = vsel %vm481, 0.0, %v466
      %v490 = vsel %vm482, 0.0, %v450
      %v491 = vsel %vm481, 0.0, %v467
      %v492 = vsel %vm482, 0.0, %v451
      %v493 = vsel %vm481, 0.0, %v468
      %v494 = vsel %vm482, 0.0, %v452
      %v495 = vsel %vm481, 0.0, %v469
      %v496 = vsel %vm482, 0.0, %v453
      %v497 = vsel %vm481, 0.0, %v470
      %v498 = vsel %vm482, 0.0, %v454
      %v499 = vsel %vm481, 0.0, %v471
      %v500 = vsel %vm482, 0.0, %v455
      %v501 = vsel %vm481, 0.0, %v472
      %v502 = vsel %vm482, 0.0, %v456
      %v503 = vsel %vm481, 0.0, %v473
      %v504 = vsel %vm482, 0.0, %v457
      %v505 = vsel %vm481, 0.0, %v474
      %v506 = vsel %vm482, 0.0, %v458
      %v507 = vsel %vm481, 0.0, %v475
      %v508 = vsel %vm482, 0.0, %v459
      %v509 = vsel %vm481, 0.0, %v476
      %v510 = vsel %vm482, 0.0, %v460
      %v511 = vsel %vm481, 0.0, %v477
      %v512 = vsel %vm482, 0.0, %v461
      %v513 = vsel %vm481, 0.0, %v478
      %v514 = vsel %vm482, 0.0, %v462
      %v515 = vperm.slane %v339, 0
      %v516 = vmul.f32 %v483, %v515
      %v517 = vmul.f32 %v484, %v515
      %v518 = vmul.f32 %v485, %v515
      %v519 = vmul.f32 %v486, %v515
      %v520 = vmul.f32 %v487, %v515
      %v521 = vmul.f32 %v488, %v515
      %v522 = vmul.f32 %v489, %v515
      %v523 = vmul.f32 %v490, %v515
      %v524 = vmul.f32 %v491, %v515
      %v525 = vmul.f32 %v492, %v515
      %v526 = vmul.f32 %v493, %v515
      %v527 = vmul.f32 %v494, %v515
      %v528 = vmul.f32 %v495, %v515
      %v529 = vmul.f32 %v496, %v515
      %v530 = vmul.f32 %v497, %v515
      %v531 = vmul.f32 %v498, %v515
      %v532 = vmul.f32 %v499, %v515
      %v533 = vmul.f32 %v500, %v515
      %v534 = vmul.f32 %v501, %v515
      %v535 = vmul.f32 %v502, %v515
      %v536 = vmul.f32 %v503, %v515
      %v537 = vmul.f32 %v504, %v515
      %v538 = vmul.f32 %v505, %v515
      %v539 = vmul.f32 %v506, %v515
      %v540 = vmul.f32 %v507, %v515
      %v541 = vmul.f32 %v508, %v515
      %v542 = vmul.f32 %v509, %v515
      %v543 = vmul.f32 %v510, %v515
      %v544 = vmul.f32 %v511, %v515
      %v545 = vmul.f32 %v512, %v515
      %v546 = vmul.f32 %v513, %v515
      %v547 = vmul.f32 %v514, %v515
      %v548 = vrot.slane %v349, 1
      %v549 = vrot.slane %v351, 1
      %v550 = vrot.slane %v353, 1
      %v551 = vrot.slane %v355, 1
      %v552 = vrot.slane %v357, 1
      %v553 = vrot.slane %v359, 1
      %v554 = vrot.slane %v361, 1
      %v555 = vrot.slane %v363, 1
      %v556 = vrot.slane %v365, 1
      %v557 = vrot.slane %v367, 1
      %v558 = vrot.slane %v369, 1
      %v559 = vrot.slane %v371, 1
      %v560 = vrot.slane %v373, 1
      %v561 = vrot.slane %v375, 1
      %v562 = vrot.slane %v377, 1
      %v563 = vrot.slane %v379, 1
      %v564 = vrot.slane %v350, 1
      %v565 = vrot.slane %v352, 1
      %v566 = vrot.slane %v354, 1
      %v567 = vrot.slane %v356, 1
      %v568 = vrot.slane %v358, 1
      %v569 = vrot.slane %v360, 1
      %v570 = vrot.slane %v362, 1
      %v571 = vrot.slane %v364, 1
      %v572 = vrot.slane %v366, 1
      %v573 = vrot.slane %v368, 1
      %v574 = vrot.slane %v370, 1
      %v575 = vrot.slane %v372, 1
      %v576 = vrot.slane %v374, 1
      %v577 = vrot.slane %v376, 1
      %v578 = vrot.slane %v378, 1
      %v579 = vrot.slane %v380, 1
      %vm580 = vcmp.lt.s32.totalorder %v343, 7
      %v581 = vsel %vm580, %v548, %v564
      %v582 = vsel %vm580, %v549, %v565
      %v583 = vsel %vm580, %v550, %v566
      %v584 = vsel %vm580, %v551, %v567
      %v585 = vsel %vm580, %v552, %v568
      %v586 = vsel %vm580, %v553, %v569
      %v587 = vsel %vm580, %v554, %v570
      %v588 = vsel %vm580, %v555, %v571
      %v589 = vsel %vm580, %v556, %v572
      %v590 = vsel %vm580, %v557, %v573
      %v591 = vsel %vm580, %v558, %v574
      %v592 = vsel %vm580, %v559, %v575
      %v593 = vsel %vm580, %v560, %v576
      %v594 = vsel %vm580, %v561, %v577
      %v595 = vsel %vm580, %v562, %v578
      %v596 = vsel %vm580, %v563, %v579
      %v597 = vsel %vm580, %v564, %v548
      %v598 = vsel %vm580, %v565, %v549
      %v599 = vsel %vm580, %v566, %v550
      %v600 = vsel %vm580, %v567, %v551
      %v601 = vsel %vm580, %v568, %v552
      %v602 = vsel %vm580, %v569, %v553
      %v603 = vsel %vm580, %v570, %v554
      %v604 = vsel %vm580, %v571, %v555
      %v605 = vsel %vm580, %v572, %v556
      %v606 = vsel %vm580, %v573, %v557
      %v607 = vsel %vm580, %v574, %v558
      %v608 = vsel %vm580, %v575, %v559
      %v609 = vsel %vm580, %v576, %v560
      %v610 = vsel %vm580, %v577, %v561
      %v611 = vsel %vm580, %v578, %v562
      %v612 = vsel %vm580, %v579, %v563
      %v613 = vsel %vm347, 1, 0
      %v614 = vsel %vm348, 1, 0
      %vm615 = vcmp.eq.s32.totalorder %v613, 1
      %vm616 = vcmp.eq.s32.totalorder %v614, 1
      %v617 = vsel %vm615, 0.0, %v581
      %v618 = vsel %vm616, 0.0, %v597
      %v619 = vsel %vm615, 0.0, %v582
      %v620 = vsel %vm616, 0.0, %v598
      %v621 = vsel %vm615, 0.0, %v583
      %v622 = vsel %vm616, 0.0, %v599
      %v623 = vsel %vm615, 0.0, %v584
      %v624 = vsel %vm616, 0.0, %v600
      %v625 = vsel %vm615, 0.0, %v585
      %v626 = vsel %vm616, 0.0, %v601
      %v627 = vsel %vm615, 0.0, %v586
      %v628 = vsel %vm616, 0.0, %v602
      %v629 = vsel %vm615, 0.0, %v587
      %v630 = vsel %vm616, 0.0, %v603
      %v631 = vsel %vm615, 0.0, %v588
      %v632 = vsel %vm616, 0.0, %v604
      %v633 = vsel %vm615, 0.0, %v589
      %v634 = vsel %vm616, 0.0, %v605
      %v635 = vsel %vm615, 0.0, %v590
      %v636 = vsel %vm616, 0.0, %v606
      %v637 = vsel %vm615, 0.0, %v591
      %v638 = vsel %vm616, 0.0, %v607
      %v639 = vsel %vm615, 0.0, %v592
      %v640 = vsel %vm616, 0.0, %v608
      %v641 = vsel %vm615, 0.0, %v593
      %v642 = vsel %vm616, 0.0, %v609
      %v643 = vsel %vm615, 0.0, %v594
      %v644 = vsel %vm616, 0.0, %v610
      %v645 = vsel %vm615, 0.0, %v595
      %v646 = vsel %vm616, 0.0, %v611
      %v647 = vsel %vm615, 0.0, %v596
      %v648 = vsel %vm616, 0.0, %v612
      %v649 = vperm.slane %v339, 2
      %v650 = vmul.f32 %v617, %v649
      %v651 = vmul.f32 %v618, %v649
      %v652 = vmul.f32 %v619, %v649
      %v653 = vmul.f32 %v620, %v649
      %v654 = vmul.f32 %v621, %v649
      %v655 = vmul.f32 %v622, %v649
      %v656 = vmul.f32 %v623, %v649
      %v657 = vmul.f32 %v624, %v649
      %v658 = vmul.f32 %v625, %v649
      %v659 = vmul.f32 %v626, %v649
      %v660 = vmul.f32 %v627, %v649
      %v661 = vmul.f32 %v628, %v649
      %v662 = vmul.f32 %v629, %v649
      %v663 = vmul.f32 %v630, %v649
      %v664 = vmul.f32 %v631, %v649
      %v665 = vmul.f32 %v632, %v649
      %v666 = vmul.f32 %v633, %v649
      %v667 = vmul.f32 %v634, %v649
      %v668 = vmul.f32 %v635, %v649
      %v669 = vmul.f32 %v636, %v649
      %v670 = vmul.f32 %v637, %v649
      %v671 = vmul.f32 %v638, %v649
      %v672 = vmul.f32 %v639, %v649
      %v673 = vmul.f32 %v640, %v649
      %v674 = vmul.f32 %v641, %v649
      %v675 = vmul.f32 %v642, %v649
      %v676 = vmul.f32 %v643, %v649
      %v677 = vmul.f32 %v644, %v649
      %v678 = vmul.f32 %v645, %v649
      %v679 = vmul.f32 %v646, %v649
      %v680 = vmul.f32 %v647, %v649
      %v681 = vmul.f32 %v648, %v649
      %v682 = vadd.f32 %v382, %v516
      %v683 = vadd.f32 %v383, %v517
      %v684 = vadd.f32 %v384, %v518
      %v685 = vadd.f32 %v385, %v519
      %v686 = vadd.f32 %v386, %v520
      %v687 = vadd.f32 %v387, %v521
      %v688 = vadd.f32 %v388, %v522
      %v689 = vadd.f32 %v389, %v523
      %v690 = vadd.f32 %v390, %v524
      %v691 = vadd.f32 %v391, %v525
      %v692 = vadd.f32 %v392, %v526
      %v693 = vadd.f32 %v393, %v527
      %v694 = vadd.f32 %v394, %v528
      %v695 = vadd.f32 %v395, %v529
      %v696 = vadd.f32 %v396, %v530
      %v697 = vadd.f32 %v397, %v531
      %v698 = vadd.f32 %v398, %v532
      %v699 = vadd.f32 %v399, %v533
      %v700 = vadd.f32 %v400, %v534
      %v701 = vadd.f32 %v401, %v535
      %v702 = vadd.f32 %v402, %v536
      %v703 = vadd.f32 %v403, %v537
      %v704 = vadd.f32 %v404, %v538
      %v705 = vadd.f32 %v405, %v539
      %v706 = vadd.f32 %v406, %v540
      %v707 = vadd.f32 %v407, %v541
      %v708 = vadd.f32 %v408, %v542
      %v709 = vadd.f32 %v409, %v543
      %v710 = vadd.f32 %v410, %v544
      %v711 = vadd.f32 %v411, %v545
      %v712 = vadd.f32 %v412, %v546
      %v713 = vadd.f32 %v413, %v547
      %v714 = vadd.f32 %v682, %v650
      %v715 = vadd.f32 %v683, %v651
      %v716 = vadd.f32 %v684, %v652
      %v717 = vadd.f32 %v685, %v653
      %v718 = vadd.f32 %v686, %v654
      %v719 = vadd.f32 %v687, %v655
      %v720 = vadd.f32 %v688, %v656
      %v721 = vadd.f32 %v689, %v657
      %v722 = vadd.f32 %v690, %v658
      %v723 = vadd.f32 %v691, %v659
      %v724 = vadd.f32 %v692, %v660
      %v725 = vadd.f32 %v693, %v661
      %v726 = vadd.f32 %v694, %v662
      %v727 = vadd.f32 %v695, %v663
      %v728 = vadd.f32 %v696, %v664
      %v729 = vadd.f32 %v697, %v665
      %v730 = vadd.f32 %v698, %v666
      %v731 = vadd.f32 %v699, %v667
      %v732 = vadd.f32 %v700, %v668
      %v733 = vadd.f32 %v701, %v669
      %v734 = vadd.f32 %v702, %v670
      %v735 = vadd.f32 %v703, %v671
      %v736 = vadd.f32 %v704, %v672
      %v737 = vadd.f32 %v705, %v673
      %v738 = vadd.f32 %v706, %v674
      %v739 = vadd.f32 %v707, %v675
      %v740 = vadd.f32 %v708, %v676
      %v741 = vadd.f32 %v709, %v677
      %v742 = vadd.f32 %v710, %v678
      %v743 = vadd.f32 %v711, %v679
      %v744 = vadd.f32 %v712, %v680
      %v745 = vadd.f32 %v713, %v681
      %v746 = vunpack.c.l.bf16 %v333
      %v747 = vunpack.c.l.bf16 %v334
      %v748 = vperm.slane %v340, 1
      %v749 = vmul.f32 %v351, %v748
      %v750 = vmul.f32 %v352, %v748
      %v751 = vmul.f32 %v353, %v748
      %v752 = vmul.f32 %v354, %v748
      %v753 = vmul.f32 %v355, %v748
      %v754 = vmul.f32 %v356, %v748
      %v755 = vmul.f32 %v357, %v748
      %v756 = vmul.f32 %v358, %v748
      %v757 = vmul.f32 %v359, %v748
      %v758 = vmul.f32 %v360, %v748
      %v759 = vmul.f32 %v361, %v748
      %v760 = vmul.f32 %v362, %v748
      %v761 = vmul.f32 %v363, %v748
      %v762 = vmul.f32 %v364, %v748
      %v763 = vmul.f32 %v365, %v748
      %v764 = vmul.f32 %v366, %v748
      %v765 = vmul.f32 %v367, %v748
      %v766 = vmul.f32 %v368, %v748
      %v767 = vmul.f32 %v369, %v748
      %v768 = vmul.f32 %v370, %v748
      %v769 = vmul.f32 %v371, %v748
      %v770 = vmul.f32 %v372, %v748
      %v771 = vmul.f32 %v373, %v748
      %v772 = vmul.f32 %v374, %v748
      %v773 = vmul.f32 %v375, %v748
      %v774 = vmul.f32 %v376, %v748
      %v775 = vmul.f32 %v377, %v748
      %v776 = vmul.f32 %v378, %v748
      %v777 = vmul.f32 %v379, %v748
      %v778 = vmul.f32 %v380, %v748
      %v779 = vmul.f32 %v746, %v748
      %v780 = vmul.f32 %v747, %v748
      %v781 = vrot.slane %v746, 7
      %v782 = vrot.slane %v747, 7
      %v783 = vsel %vm446, %v781, %v782
      %v784 = vsel %vm446, %v782, %v781
      %v785 = vsel %vm481, 0.0, %v784
      %v786 = vsel %vm482, 0.0, %v783
      %v787 = vperm.slane %v340, 0
      %v788 = vmul.f32 %v485, %v787
      %v789 = vmul.f32 %v486, %v787
      %v790 = vmul.f32 %v487, %v787
      %v791 = vmul.f32 %v488, %v787
      %v792 = vmul.f32 %v489, %v787
      %v793 = vmul.f32 %v490, %v787
      %v794 = vmul.f32 %v491, %v787
      %v795 = vmul.f32 %v492, %v787
      %v796 = vmul.f32 %v493, %v787
      %v797 = vmul.f32 %v494, %v787
      %v798 = vmul.f32 %v495, %v787
      %v799 = vmul.f32 %v496, %v787
      %v800 = vmul.f32 %v497, %v787
      %v801 = vmul.f32 %v498, %v787
      %v802 = vmul.f32 %v499, %v787
      %v803 = vmul.f32 %v500, %v787
      %v804 = vmul.f32 %v501, %v787
      %v805 = vmul.f32 %v502, %v787
      %v806 = vmul.f32 %v503, %v787
      %v807 = vmul.f32 %v504, %v787
      %v808 = vmul.f32 %v505, %v787
      %v809 = vmul.f32 %v506, %v787
      %v810 = vmul.f32 %v507, %v787
      %v811 = vmul.f32 %v508, %v787
      %v812 = vmul.f32 %v509, %v787
      %v813 = vmul.f32 %v510, %v787
      %v814 = vmul.f32 %v511, %v787
      %v815 = vmul.f32 %v512, %v787
      %v816 = vmul.f32 %v513, %v787
      %v817 = vmul.f32 %v514, %v787
      %v818 = vmul.f32 %v785, %v787
      %v819 = vmul.f32 %v786, %v787
      %v820 = vrot.slane %v746, 1
      %v821 = vrot.slane %v747, 1
      %v822 = vsel %vm580, %v820, %v821
      %v823 = vsel %vm580, %v821, %v820
      %v824 = vsel %vm615, 0.0, %v822
      %v825 = vsel %vm616, 0.0, %v823
      %v826 = vperm.slane %v340, 2
      %v827 = vmul.f32 %v619, %v826
      %v828 = vmul.f32 %v620, %v826
      %v829 = vmul.f32 %v621, %v826
      %v830 = vmul.f32 %v622, %v826
      %v831 = vmul.f32 %v623, %v826
      %v832 = vmul.f32 %v624, %v826
      %v833 = vmul.f32 %v625, %v826
      %v834 = vmul.f32 %v626, %v826
      %v835 = vmul.f32 %v627, %v826
      %v836 = vmul.f32 %v628, %v826
      %v837 = vmul.f32 %v629, %v826
      %v838 = vmul.f32 %v630, %v826
      %v839 = vmul.f32 %v631, %v826
      %v840 = vmul.f32 %v632, %v826
      %v841 = vmul.f32 %v633, %v826
      %v842 = vmul.f32 %v634, %v826
      %v843 = vmul.f32 %v635, %v826
      %v844 = vmul.f32 %v636, %v826
      %v845 = vmul.f32 %v637, %v826
      %v846 = vmul.f32 %v638, %v826
      %v847 = vmul.f32 %v639, %v826
      %v848 = vmul.f32 %v640, %v826
      %v849 = vmul.f32 %v641, %v826
      %v850 = vmul.f32 %v642, %v826
      %v851 = vmul.f32 %v643, %v826
      %v852 = vmul.f32 %v644, %v826
      %v853 = vmul.f32 %v645, %v826
      %v854 = vmul.f32 %v646, %v826
      %v855 = vmul.f32 %v647, %v826
      %v856 = vmul.f32 %v648, %v826
      %v857 = vmul.f32 %v824, %v826
      %v858 = vmul.f32 %v825, %v826
      %v859 = vadd.f32 %v749, %v788
      %v860 = vadd.f32 %v750, %v789
      %v861 = vadd.f32 %v751, %v790
      %v862 = vadd.f32 %v752, %v791
      %v863 = vadd.f32 %v753, %v792
      %v864 = vadd.f32 %v754, %v793
      %v865 = vadd.f32 %v755, %v794
      %v866 = vadd.f32 %v756, %v795
      %v867 = vadd.f32 %v757, %v796
      %v868 = vadd.f32 %v758, %v797
      %v869 = vadd.f32 %v759, %v798
      %v870 = vadd.f32 %v760, %v799
      %v871 = vadd.f32 %v761, %v800
      %v872 = vadd.f32 %v762, %v801
      %v873 = vadd.f32 %v763, %v802
      %v874 = vadd.f32 %v764, %v803
      %v875 = vadd.f32 %v765, %v804
      %v876 = vadd.f32 %v766, %v805
      %v877 = vadd.f32 %v767, %v806
      %v878 = vadd.f32 %v768, %v807
      %v879 = vadd.f32 %v769, %v808
      %v880 = vadd.f32 %v770, %v809
      %v881 = vadd.f32 %v771, %v810
      %v882 = vadd.f32 %v772, %v811
      %v883 = vadd.f32 %v773, %v812
      %v884 = vadd.f32 %v774, %v813
      %v885 = vadd.f32 %v775, %v814
      %v886 = vadd.f32 %v776, %v815
      %v887 = vadd.f32 %v777, %v816
      %v888 = vadd.f32 %v778, %v817
      %v889 = vadd.f32 %v779, %v818
      %v890 = vadd.f32 %v780, %v819
      %v891 = vadd.f32 %v859, %v827
      %v892 = vadd.f32 %v860, %v828
      %v893 = vadd.f32 %v861, %v829
      %v894 = vadd.f32 %v862, %v830
      %v895 = vadd.f32 %v863, %v831
      %v896 = vadd.f32 %v864, %v832
      %v897 = vadd.f32 %v865, %v833
      %v898 = vadd.f32 %v866, %v834
      %v899 = vadd.f32 %v867, %v835
      %v900 = vadd.f32 %v868, %v836
      %v901 = vadd.f32 %v869, %v837
      %v902 = vadd.f32 %v870, %v838
      %v903 = vadd.f32 %v871, %v839
      %v904 = vadd.f32 %v872, %v840
      %v905 = vadd.f32 %v873, %v841
      %v906 = vadd.f32 %v874, %v842
      %v907 = vadd.f32 %v875, %v843
      %v908 = vadd.f32 %v876, %v844
      %v909 = vadd.f32 %v877, %v845
      %v910 = vadd.f32 %v878, %v846
      %v911 = vadd.f32 %v879, %v847
      %v912 = vadd.f32 %v880, %v848
      %v913 = vadd.f32 %v881, %v849
      %v914 = vadd.f32 %v882, %v850
      %v915 = vadd.f32 %v883, %v851
      %v916 = vadd.f32 %v884, %v852
      %v917 = vadd.f32 %v885, %v853
      %v918 = vadd.f32 %v886, %v854
      %v919 = vadd.f32 %v887, %v855
      %v920 = vadd.f32 %v888, %v856
      %v921 = vadd.f32 %v889, %v857
      %v922 = vadd.f32 %v890, %v858
      %v923 = vadd.f32 %v714, %v891
      %v924 = vadd.f32 %v715, %v892
      %v925 = vadd.f32 %v716, %v893
      %v926 = vadd.f32 %v717, %v894
      %v927 = vadd.f32 %v718, %v895
      %v928 = vadd.f32 %v719, %v896
      %v929 = vadd.f32 %v720, %v897
      %v930 = vadd.f32 %v721, %v898
      %v931 = vadd.f32 %v722, %v899
      %v932 = vadd.f32 %v723, %v900
      %v933 = vadd.f32 %v724, %v901
      %v934 = vadd.f32 %v725, %v902
      %v935 = vadd.f32 %v726, %v903
      %v936 = vadd.f32 %v727, %v904
      %v937 = vadd.f32 %v728, %v905
      %v938 = vadd.f32 %v729, %v906
      %v939 = vadd.f32 %v730, %v907
      %v940 = vadd.f32 %v731, %v908
      %v941 = vadd.f32 %v732, %v909
      %v942 = vadd.f32 %v733, %v910
      %v943 = vadd.f32 %v734, %v911
      %v944 = vadd.f32 %v735, %v912
      %v945 = vadd.f32 %v736, %v913
      %v946 = vadd.f32 %v737, %v914
      %v947 = vadd.f32 %v738, %v915
      %v948 = vadd.f32 %v739, %v916
      %v949 = vadd.f32 %v740, %v917
      %v950 = vadd.f32 %v741, %v918
      %v951 = vadd.f32 %v742, %v919
      %v952 = vadd.f32 %v743, %v920
      %v953 = vadd.f32 %v744, %v921
      %v954 = vadd.f32 %v745, %v922
      %v955 = vunpack.c.l.bf16 %v337
      %v956 = vunpack.c.l.bf16 %v338
      %v957 = vperm.slane %v341, 1
      %v958 = vmul.f32 %v353, %v957
      %v959 = vmul.f32 %v354, %v957
      %v960 = vmul.f32 %v355, %v957
      %v961 = vmul.f32 %v356, %v957
      %v962 = vmul.f32 %v357, %v957
      %v963 = vmul.f32 %v358, %v957
      %v964 = vmul.f32 %v359, %v957
      %v965 = vmul.f32 %v360, %v957
      %v966 = vmul.f32 %v361, %v957
      %v967 = vmul.f32 %v362, %v957
      %v968 = vmul.f32 %v363, %v957
      %v969 = vmul.f32 %v364, %v957
      %v970 = vmul.f32 %v365, %v957
      %v971 = vmul.f32 %v366, %v957
      %v972 = vmul.f32 %v367, %v957
      %v973 = vmul.f32 %v368, %v957
      %v974 = vmul.f32 %v369, %v957
      %v975 = vmul.f32 %v370, %v957
      %v976 = vmul.f32 %v371, %v957
      %v977 = vmul.f32 %v372, %v957
      %v978 = vmul.f32 %v373, %v957
      %v979 = vmul.f32 %v374, %v957
      %v980 = vmul.f32 %v375, %v957
      %v981 = vmul.f32 %v376, %v957
      %v982 = vmul.f32 %v377, %v957
      %v983 = vmul.f32 %v378, %v957
      %v984 = vmul.f32 %v379, %v957
      %v985 = vmul.f32 %v380, %v957
      %v986 = vmul.f32 %v746, %v957
      %v987 = vmul.f32 %v747, %v957
      %v988 = vmul.f32 %v955, %v957
      %v989 = vmul.f32 %v956, %v957
      %v990 = vrot.slane %v955, 7
      %v991 = vrot.slane %v956, 7
      %v992 = vsel %vm446, %v990, %v991
      %v993 = vsel %vm446, %v991, %v990
      %v994 = vsel %vm481, 0.0, %v993
      %v995 = vsel %vm482, 0.0, %v992
      %v996 = vperm.slane %v341, 0
      %v997 = vmul.f32 %v487, %v996
      %v998 = vmul.f32 %v488, %v996
      %v999 = vmul.f32 %v489, %v996
      %v1000 = vmul.f32 %v490, %v996
      %v1001 = vmul.f32 %v491, %v996
      %v1002 = vmul.f32 %v492, %v996
      %v1003 = vmul.f32 %v493, %v996
      %v1004 = vmul.f32 %v494, %v996
      %v1005 = vmul.f32 %v495, %v996
      %v1006 = vmul.f32 %v496, %v996
      %v1007 = vmul.f32 %v497, %v996
      %v1008 = vmul.f32 %v498, %v996
      %v1009 = vmul.f32 %v499, %v996
      %v1010 = vmul.f32 %v500, %v996
      %v1011 = vmul.f32 %v501, %v996
      %v1012 = vmul.f32 %v502, %v996
      %v1013 = vmul.f32 %v503, %v996
      %v1014 = vmul.f32 %v504, %v996
      %v1015 = vmul.f32 %v505, %v996
      %v1016 = vmul.f32 %v506, %v996
      %v1017 = vmul.f32 %v507, %v996
      %v1018 = vmul.f32 %v508, %v996
      %v1019 = vmul.f32 %v509, %v996
      %v1020 = vmul.f32 %v510, %v996
      %v1021 = vmul.f32 %v511, %v996
      %v1022 = vmul.f32 %v512, %v996
      %v1023 = vmul.f32 %v513, %v996
      %v1024 = vmul.f32 %v514, %v996
      %v1025 = vmul.f32 %v785, %v996
      %v1026 = vmul.f32 %v786, %v996
      %v1027 = vmul.f32 %v994, %v996
      %v1028 = vmul.f32 %v995, %v996
      %v1029 = vrot.slane %v955, 1
      %v1030 = vrot.slane %v956, 1
      %v1031 = vsel %vm580, %v1029, %v1030
      %v1032 = vsel %vm580, %v1030, %v1029
      %v1033 = vsel %vm615, 0.0, %v1031
      %v1034 = vsel %vm616, 0.0, %v1032
      %v1035 = vperm.slane %v341, 2
      %v1036 = vmul.f32 %v621, %v1035
      %v1037 = vmul.f32 %v622, %v1035
      %v1038 = vmul.f32 %v623, %v1035
      %v1039 = vmul.f32 %v624, %v1035
      %v1040 = vmul.f32 %v625, %v1035
      %v1041 = vmul.f32 %v626, %v1035
      %v1042 = vmul.f32 %v627, %v1035
      %v1043 = vmul.f32 %v628, %v1035
      %v1044 = vmul.f32 %v629, %v1035
      %v1045 = vmul.f32 %v630, %v1035
      %v1046 = vmul.f32 %v631, %v1035
      %v1047 = vmul.f32 %v632, %v1035
      %v1048 = vmul.f32 %v633, %v1035
      %v1049 = vmul.f32 %v634, %v1035
      %v1050 = vmul.f32 %v635, %v1035
      %v1051 = vmul.f32 %v636, %v1035
      %v1052 = vmul.f32 %v637, %v1035
      %v1053 = vmul.f32 %v638, %v1035
      %v1054 = vmul.f32 %v639, %v1035
      %v1055 = vmul.f32 %v640, %v1035
      %v1056 = vmul.f32 %v641, %v1035
      %v1057 = vmul.f32 %v642, %v1035
      %v1058 = vmul.f32 %v643, %v1035
      %v1059 = vmul.f32 %v644, %v1035
      %v1060 = vmul.f32 %v645, %v1035
      %v1061 = vmul.f32 %v646, %v1035
      %v1062 = vmul.f32 %v647, %v1035
      %v1063 = vmul.f32 %v648, %v1035
      %v1064 = vmul.f32 %v824, %v1035
      %v1065 = vmul.f32 %v825, %v1035
      %v1066 = vmul.f32 %v1033, %v1035
      %v1067 = vmul.f32 %v1034, %v1035
      %v1068 = vadd.f32 %v958, %v997
      %v1069 = vadd.f32 %v959, %v998
      %v1070 = vadd.f32 %v960, %v999
      %v1071 = vadd.f32 %v961, %v1000
      %v1072 = vadd.f32 %v962, %v1001
      %v1073 = vadd.f32 %v963, %v1002
      %v1074 = vadd.f32 %v964, %v1003
      %v1075 = vadd.f32 %v965, %v1004
      %v1076 = vadd.f32 %v966, %v1005
      %v1077 = vadd.f32 %v967, %v1006
      %v1078 = vadd.f32 %v968, %v1007
      %v1079 = vadd.f32 %v969, %v1008
      %v1080 = vadd.f32 %v970, %v1009
      %v1081 = vadd.f32 %v971, %v1010
      %v1082 = vadd.f32 %v972, %v1011
      %v1083 = vadd.f32 %v973, %v1012
      %v1084 = vadd.f32 %v974, %v1013
      %v1085 = vadd.f32 %v975, %v1014
      %v1086 = vadd.f32 %v976, %v1015
      %v1087 = vadd.f32 %v977, %v1016
      %v1088 = vadd.f32 %v978, %v1017
      %v1089 = vadd.f32 %v979, %v1018
      %v1090 = vadd.f32 %v980, %v1019
      %v1091 = vadd.f32 %v981, %v1020
      %v1092 = vadd.f32 %v982, %v1021
      %v1093 = vadd.f32 %v983, %v1022
      %v1094 = vadd.f32 %v984, %v1023
      %v1095 = vadd.f32 %v985, %v1024
      %v1096 = vadd.f32 %v986, %v1025
      %v1097 = vadd.f32 %v987, %v1026
      %v1098 = vadd.f32 %v988, %v1027
      %v1099 = vadd.f32 %v989, %v1028
      %v1100 = vadd.f32 %v1068, %v1036
      %v1101 = vadd.f32 %v1069, %v1037
      %v1102 = vadd.f32 %v1070, %v1038
      %v1103 = vadd.f32 %v1071, %v1039
      %v1104 = vadd.f32 %v1072, %v1040
      %v1105 = vadd.f32 %v1073, %v1041
      %v1106 = vadd.f32 %v1074, %v1042
      %v1107 = vadd.f32 %v1075, %v1043
      %v1108 = vadd.f32 %v1076, %v1044
      %v1109 = vadd.f32 %v1077, %v1045
      %v1110 = vadd.f32 %v1078, %v1046
      %v1111 = vadd.f32 %v1079, %v1047
      %v1112 = vadd.f32 %v1080, %v1048
      %v1113 = vadd.f32 %v1081, %v1049
      %v1114 = vadd.f32 %v1082, %v1050
      %v1115 = vadd.f32 %v1083, %v1051
      %v1116 = vadd.f32 %v1084, %v1052
      %v1117 = vadd.f32 %v1085, %v1053
      %v1118 = vadd.f32 %v1086, %v1054
      %v1119 = vadd.f32 %v1087, %v1055
      %v1120 = vadd.f32 %v1088, %v1056
      %v1121 = vadd.f32 %v1089, %v1057
      %v1122 = vadd.f32 %v1090, %v1058
      %v1123 = vadd.f32 %v1091, %v1059
      %v1124 = vadd.f32 %v1092, %v1060
      %v1125 = vadd.f32 %v1093, %v1061
      %v1126 = vadd.f32 %v1094, %v1062
      %v1127 = vadd.f32 %v1095, %v1063
      %v1128 = vadd.f32 %v1096, %v1064
      %v1129 = vadd.f32 %v1097, %v1065
      %v1130 = vadd.f32 %v1098, %v1066
      %v1131 = vadd.f32 %v1099, %v1067
      %v1132 = vadd.f32 %v923, %v1100
      %v1133 = vadd.f32 %v924, %v1101
      %v1134 = vadd.f32 %v925, %v1102
      %v1135 = vadd.f32 %v926, %v1103
      %v1136 = vadd.f32 %v927, %v1104
      %v1137 = vadd.f32 %v928, %v1105
      %v1138 = vadd.f32 %v929, %v1106
      %v1139 = vadd.f32 %v930, %v1107
      %v1140 = vadd.f32 %v931, %v1108
      %v1141 = vadd.f32 %v932, %v1109
      %v1142 = vadd.f32 %v933, %v1110
      %v1143 = vadd.f32 %v934, %v1111
      %v1144 = vadd.f32 %v935, %v1112
      %v1145 = vadd.f32 %v936, %v1113
      %v1146 = vadd.f32 %v937, %v1114
      %v1147 = vadd.f32 %v938, %v1115
      %v1148 = vadd.f32 %v939, %v1116
      %v1149 = vadd.f32 %v940, %v1117
      %v1150 = vadd.f32 %v941, %v1118
      %v1151 = vadd.f32 %v942, %v1119
      %v1152 = vadd.f32 %v943, %v1120
      %v1153 = vadd.f32 %v944, %v1121
      %v1154 = vadd.f32 %v945, %v1122
      %v1155 = vadd.f32 %v946, %v1123
      %v1156 = vadd.f32 %v947, %v1124
      %v1157 = vadd.f32 %v948, %v1125
      %v1158 = vadd.f32 %v949, %v1126
      %v1159 = vadd.f32 %v950, %v1127
      %v1160 = vadd.f32 %v951, %v1128
      %v1161 = vadd.f32 %v952, %v1129
      %v1162 = vadd.f32 %v953, %v1130
      %v1163 = vadd.f32 %v954, %v1131
      %v1164 = vpack.c.bf16 %v1133, %v1132
      %v1165 = vpack.c.bf16 %v1135, %v1134
      %v1166 = vpack.c.bf16 %v1137, %v1136
      %v1167 = vpack.c.bf16 %v1139, %v1138
      %v1168 = vpack.c.bf16 %v1141, %v1140
      %v1169 = vpack.c.bf16 %v1143, %v1142
      %v1170 = vpack.c.bf16 %v1145, %v1144
      %v1171 = vpack.c.bf16 %v1147, %v1146
      %v1172 = vpack.c.bf16 %v1149, %v1148
      %v1173 = vpack.c.bf16 %v1151, %v1150
      %v1174 = vpack.c.bf16 %v1153, %v1152
      %v1175 = vpack.c.bf16 %v1155, %v1154
      %v1176 = vpack.c.bf16 %v1157, %v1156
      %v1177 = vpack.c.bf16 %v1159, %v1158
      %v1178 = vpack.c.bf16 %v1161, %v1160
      %v1179 = vpack.c.bf16 %v1163, %v1162
      %v1180 = vld [vmem:[%s3] sm:$0xf]
      %v1181 = vld [vmem:[%s3 + $0x4] sm:$0xf]
      %v1182 = vld [vmem:[%s3 + $0x8] sm:$0xf]
      %v1183 = vld [vmem:[%s3 + $0xc] sm:$0xf]
      %v1184 = vld [vmem:[%s3 + $0x10] sm:$0xf]
      %v1185 = vld [vmem:[%s3 + $0x14] sm:$0xf]
      %v1186 = vld [vmem:[%s3 + $0x18] sm:$0xf]
      %v1187 = vld [vmem:[%s3 + $0x1c] sm:$0xf]
      %v1188 = vld [vmem:[%s3 + $0x20] sm:$0xf]
      %v1189 = vld [vmem:[%s3 + $0x24] sm:$0xf]
      %v1190 = vld [vmem:[%s3 + $0x28] sm:$0xf]
      %v1191 = vld [vmem:[%s3 + $0x2c] sm:$0xf]
      %v1192 = vld [vmem:[%s3 + $0x30] sm:$0xf]
      %v1193 = vld [vmem:[%s3 + $0x34] sm:$0xf]
      %v1194 = vld [vmem:[%s3 + $0x38] sm:$0xf]
      %v1195 = vld [vmem:[%s3 + $0x3c] sm:$0xf]
      %v1212 = vunpack.c.l.b16 %v1180
      %v1213 = vunpack.c.l.b16 %v1181
      %v1214 = vunpack.c.l.b16 %v1182
      %v1215 = vunpack.c.l.b16 %v1183
      %v1216 = vunpack.c.l.b16 %v1184
      %v1217 = vunpack.c.l.b16 %v1185
      %v1218 = vunpack.c.l.b16 %v1186
      %v1219 = vunpack.c.l.b16 %v1187
      %v1220 = vunpack.c.l.b16 %v1188
      %v1221 = vunpack.c.l.b16 %v1189
      %v1222 = vunpack.c.l.b16 %v1190
      %v1223 = vunpack.c.l.b16 %v1191
      %v1224 = vunpack.c.l.b16 %v1192
      %v1225 = vunpack.c.l.b16 %v1193
      %v1226 = vunpack.c.l.b16 %v1194
      %v1227 = vunpack.c.l.b16 %v1195
      %v1228 = vpack.c.b16 %v1213, %v1212
      %v1229 = vpack.c.b16 %v1215, %v1214
      %v1230 = vpack.c.b16 %v1217, %v1216
      %v1231 = vpack.c.b16 %v1219, %v1218
      %v1232 = vpack.c.b16 %v1221, %v1220
      %v1233 = vpack.c.b16 %v1223, %v1222
      %v1234 = vpack.c.b16 %v1225, %v1224
      %v1235 = vpack.c.b16 %v1227, %v1226
      %1244 = vmatpush.bf16.msra.mxu0 %v1235
      %1245 = vmatpush.bf16.msra.mxu0 %v1234
      %1246 = vmatpush.bf16.msra.mxu0 %v1233
      %1247 = vmatpush.bf16.msra.mxu0 %v1232
      %1248 = vmatpush.bf16.msra.mxu0 %v1231
      %1249 = vmatpush.bf16.msra.mxu0 %v1230
      %1250 = vmatpush.bf16.msra.mxu0 %v1229
      %1251 = vmatpush.bf16.msra.mxu0 %v1228
      %1252 = vmatmul.bf16.gmra.mxu0 %v1164
      %v1253 = vpop.f32.mrf.mxu0
      %v1254 = vadd.f32 0.0, %v1253
      %v1255 = vpop.f32.mrf.mxu0
      %v1256 = vadd.f32 0.0, %v1255
      %1257 = vmatmul.bf16.gmra.mxu0 %v1165
      %v1258 = vpop.f32.mrf.mxu0
      %v1259 = vadd.f32 0.0, %v1258
      %v1260 = vpop.f32.mrf.mxu0
      %v1261 = vadd.f32 0.0, %v1260
      %1262 = vmatmul.bf16.gmra.mxu0 %v1166
      %v1263 = vpop.f32.mrf.mxu0
      %v1264 = vadd.f32 0.0, %v1263
      %v1265 = vpop.f32.mrf.mxu0
      %v1266 = vadd.f32 0.0, %v1265
      %1267 = vmatmul.bf16.gmra.mxu0 %v1167
      %v1268 = vpop.f32.mrf.mxu0
      %v1269 = vadd.f32 0.0, %v1268
      %v1270 = vpop.f32.mrf.mxu0
      %v1271 = vadd.f32 0.0, %v1270
      %1272 = vmatmul.bf16.gmra.mxu0 %v1168
      %v1273 = vpop.f32.mrf.mxu0
      %v1274 = vadd.f32 0.0, %v1273
      %v1275 = vpop.f32.mrf.mxu0
      %v1276 = vadd.f32 0.0, %v1275
      %1277 = vmatmul.bf16.gmra.mxu0 %v1169
      %v1278 = vpop.f32.mrf.mxu0
      %v1279 = vadd.f32 0.0, %v1278
      %v1280 = vpop.f32.mrf.mxu0
      %v1281 = vadd.f32 0.0, %v1280
      %1282 = vmatmul.bf16.gmra.mxu0 %v1170
      %v1283 = vpop.f32.mrf.mxu0
      %v1284 = vadd.f32 0.0, %v1283
      %v1285 = vpop.f32.mrf.mxu0
      %v1286 = vadd.f32 0.0, %v1285
      %1287 = vmatmul.bf16.gmra.mxu0 %v1171
      %v1288 = vpop.f32.mrf.mxu0
      %v1289 = vadd.f32 0.0, %v1288
      %v1290 = vpop.f32.mrf.mxu0
      %v1291 = vadd.f32 0.0, %v1290
      %1292 = vmatmul.bf16.gmra.mxu0 %v1172
      %v1293 = vpop.f32.mrf.mxu0
      %v1294 = vadd.f32 0.0, %v1293
      %v1295 = vpop.f32.mrf.mxu0
      %v1296 = vadd.f32 0.0, %v1295
      %1297 = vmatmul.bf16.gmra.mxu0 %v1173
      %v1298 = vpop.f32.mrf.mxu0
      %v1299 = vadd.f32 0.0, %v1298
      %v1300 = vpop.f32.mrf.mxu0
      %v1301 = vadd.f32 0.0, %v1300
      %1302 = vmatmul.bf16.gmra.mxu0 %v1174
      %v1303 = vpop.f32.mrf.mxu0
      %v1304 = vadd.f32 0.0, %v1303
      %v1305 = vpop.f32.mrf.mxu0
      %v1306 = vadd.f32 0.0, %v1305
      %1307 = vmatmul.bf16.gmra.mxu0 %v1175
      %v1308 = vpop.f32.mrf.mxu0
      %v1309 = vadd.f32 0.0, %v1308
      %v1310 = vpop.f32.mrf.mxu0
      %v1311 = vadd.f32 0.0, %v1310
      %1312 = vmatmul.bf16.gmra.mxu0 %v1176
      %v1313 = vpop.f32.mrf.mxu0
      %v1314 = vadd.f32 0.0, %v1313
      %v1315 = vpop.f32.mrf.mxu0
      %v1316 = vadd.f32 0.0, %v1315
      %1317 = vmatmul.bf16.gmra.mxu0 %v1177
      %v1318 = vpop.f32.mrf.mxu0
      %v1319 = vadd.f32 0.0, %v1318
      %v1320 = vpop.f32.mrf.mxu0
      %v1321 = vadd.f32 0.0, %v1320
      %1322 = vmatmul.bf16.gmra.mxu0 %v1178
      %v1323 = vpop.f32.mrf.mxu0
      %v1324 = vadd.f32 0.0, %v1323
      %v1325 = vpop.f32.mrf.mxu0
      %v1326 = vadd.f32 0.0, %v1325
      %1327 = vmatmul.bf16.gmra.mxu0 %v1179
      %v1328 = vpop.f32.mrf.mxu0
      %v1329 = vadd.f32 0.0, %v1328
      %v1330 = vpop.f32.mrf.mxu0
      %v1331 = vadd.f32 0.0, %v1330
      %1332 = vdwg.mxu0
      %v1333 = vld [vmem:[%s4] sm:$0x1]
      %v1334 = vperm.slane %v1333, 0
      %v1335 = vmul.f32 %v1254, %v1334
      %v1336 = vmul.f32 %v1256, %v1334
      %v1337 = vmul.f32 %v1259, %v1334
      %v1338 = vmul.f32 %v1261, %v1334
      %v1339 = vmul.f32 %v1264, %v1334
      %v1340 = vmul.f32 %v1266, %v1334
      %v1341 = vmul.f32 %v1269, %v1334
      %v1342 = vmul.f32 %v1271, %v1334
      %v1343 = vmul.f32 %v1274, %v1334
      %v1344 = vmul.f32 %v1276, %v1334
      %v1345 = vmul.f32 %v1279, %v1334
      %v1346 = vmul.f32 %v1281, %v1334
      %v1347 = vmul.f32 %v1284, %v1334
      %v1348 = vmul.f32 %v1286, %v1334
      %v1349 = vmul.f32 %v1289, %v1334
      %v1350 = vmul.f32 %v1291, %v1334
      %v1351 = vmul.f32 %v1294, %v1334
      %v1352 = vmul.f32 %v1296, %v1334
      %v1353 = vmul.f32 %v1299, %v1334
      %v1354 = vmul.f32 %v1301, %v1334
      %v1355 = vmul.f32 %v1304, %v1334
      %v1356 = vmul.f32 %v1306, %v1334
      %v1357 = vmul.f32 %v1309, %v1334
      %v1358 = vmul.f32 %v1311, %v1334
      %v1359 = vmul.f32 %v1314, %v1334
      %v1360 = vmul.f32 %v1316, %v1334
      %v1361 = vmul.f32 %v1319, %v1334
      %v1362 = vmul.f32 %v1321, %v1334
      %v1363 = vmul.f32 %v1324, %v1334
      %v1364 = vmul.f32 %v1326, %v1334
      %v1365 = vmul.f32 %v1329, %v1334
      %v1366 = vmul.f32 %v1331, %v1334
      %v1367 = vld [vmem:[%s4 + $0x1] sm:$0x1]
      %v1368 = vperm.slane %v1367, 0
      %v1369 = vadd.f32 %v1335, %v1368
      %v1370 = vadd.f32 %v1336, %v1368
      %v1371 = vadd.f32 %v1337, %v1368
      %v1372 = vadd.f32 %v1338, %v1368
      %v1373 = vadd.f32 %v1339, %v1368
      %v1374 = vadd.f32 %v1340, %v1368
      %v1375 = vadd.f32 %v1341, %v1368
      %v1376 = vadd.f32 %v1342, %v1368
      %v1377 = vadd.f32 %v1343, %v1368
      %v1378 = vadd.f32 %v1344, %v1368
      %v1379 = vadd.f32 %v1345, %v1368
      %v1380 = vadd.f32 %v1346, %v1368
      %v1381 = vadd.f32 %v1347, %v1368
      %v1382 = vadd.f32 %v1348, %v1368
      %v1383 = vadd.f32 %v1349, %v1368
      %v1384 = vadd.f32 %v1350, %v1368
      %v1385 = vadd.f32 %v1351, %v1368
      %v1386 = vadd.f32 %v1352, %v1368
      %v1387 = vadd.f32 %v1353, %v1368
      %v1388 = vadd.f32 %v1354, %v1368
      %v1389 = vadd.f32 %v1355, %v1368
      %v1390 = vadd.f32 %v1356, %v1368
      %v1391 = vadd.f32 %v1357, %v1368
      %v1392 = vadd.f32 %v1358, %v1368
      %v1393 = vadd.f32 %v1359, %v1368
      %v1394 = vadd.f32 %v1360, %v1368
      %v1395 = vadd.f32 %v1361, %v1368
      %v1396 = vadd.f32 %v1362, %v1368
      %v1397 = vadd.f32 %v1363, %v1368
      %v1398 = vadd.f32 %v1364, %v1368
      %v1399 = vadd.f32 %v1365, %v1368
      %v1400 = vadd.f32 %v1366, %v1368
      %v1401 = vmax.f32 %v1369, 0.0
      %v1402 = vmax.f32 %v1370, 0.0
      %v1403 = vmax.f32 %v1371, 0.0
      %v1404 = vmax.f32 %v1372, 0.0
      %v1405 = vmax.f32 %v1373, 0.0
      %v1406 = vmax.f32 %v1374, 0.0
      %v1407 = vmax.f32 %v1375, 0.0
      %v1408 = vmax.f32 %v1376, 0.0
      %v1409 = vmax.f32 %v1377, 0.0
      %v1410 = vmax.f32 %v1378, 0.0
      %v1411 = vmax.f32 %v1379, 0.0
      %v1412 = vmax.f32 %v1380, 0.0
      %v1413 = vmax.f32 %v1381, 0.0
      %v1414 = vmax.f32 %v1382, 0.0
      %v1415 = vmax.f32 %v1383, 0.0
      %v1416 = vmax.f32 %v1384, 0.0
      %v1417 = vmax.f32 %v1385, 0.0
      %v1418 = vmax.f32 %v1386, 0.0
      %v1419 = vmax.f32 %v1387, 0.0
      %v1420 = vmax.f32 %v1388, 0.0
      %v1421 = vmax.f32 %v1389, 0.0
      %v1422 = vmax.f32 %v1390, 0.0
      %v1423 = vmax.f32 %v1391, 0.0
      %v1424 = vmax.f32 %v1392, 0.0
      %v1425 = vmax.f32 %v1393, 0.0
      %v1426 = vmax.f32 %v1394, 0.0
      %v1427 = vmax.f32 %v1395, 0.0
      %v1428 = vmax.f32 %v1396, 0.0
      %v1429 = vmax.f32 %v1397, 0.0
      %v1430 = vmax.f32 %v1398, 0.0
      %v1431 = vmax.f32 %v1399, 0.0
      %v1432 = vmax.f32 %v1400, 0.0
      %1433 = vst [vmem:[%s301] sm:$0xff] %v1401
      %1434 = vst [vmem:[%s301 + $0x8] sm:$0xff] %v1402
      %1435 = vst [vmem:[%s301 + $0x10] sm:$0xff] %v1403
      %1436 = vst [vmem:[%s301 + $0x18] sm:$0xff] %v1404
      %1437 = vst [vmem:[%s301 + $0x20] sm:$0xff] %v1405
      %1438 = vst [vmem:[%s301 + $0x28] sm:$0xff] %v1406
      %1439 = vst [vmem:[%s301 + $0x30] sm:$0xff] %v1407
      %1440 = vst [vmem:[%s301 + $0x38] sm:$0xff] %v1408
      %1441 = vst [vmem:[%s301 + $0x40] sm:$0xff] %v1409
      %1442 = vst [vmem:[%s301 + $0x48] sm:$0xff] %v1410
      %1443 = vst [vmem:[%s301 + $0x50] sm:$0xff] %v1411
      %1444 = vst [vmem:[%s301 + $0x58] sm:$0xff] %v1412
      %1445 = vst [vmem:[%s301 + $0x60] sm:$0xff] %v1413
      %1446 = vst [vmem:[%s301 + $0x68] sm:$0xff] %v1414
      %1447 = vst [vmem:[%s301 + $0x70] sm:$0xff] %v1415
      %1448 = vst [vmem:[%s301 + $0x78] sm:$0xff] %v1416
      %1449 = vst [vmem:[%s301 + $0x80] sm:$0xff] %v1417
      %1450 = vst [vmem:[%s301 + $0x88] sm:$0xff] %v1418
      %1451 = vst [vmem:[%s301 + $0x90] sm:$0xff] %v1419
      %1452 = vst [vmem:[%s301 + $0x98] sm:$0xff] %v1420
      %1453 = vst [vmem:[%s301 + $0xa0] sm:$0xff] %v1421
      %1454 = vst [vmem:[%s301 + $0xa8] sm:$0xff] %v1422
      %1455 = vst [vmem:[%s301 + $0xb0] sm:$0xff] %v1423
      %1456 = vst [vmem:[%s301 + $0xb8] sm:$0xff] %v1424
      %1457 = vst [vmem:[%s301 + $0xc0] sm:$0xff] %v1425
      %1458 = vst [vmem:[%s301 + $0xc8] sm:$0xff] %v1426
      %1459 = vst [vmem:[%s301 + $0xd0] sm:$0xff] %v1427
      %1460 = vst [vmem:[%s301 + $0xd8] sm:$0xff] %v1428
      %1461 = vst [vmem:[%s301 + $0xe0] sm:$0xff] %v1429
      %1462 = vst [vmem:[%s301 + $0xe8] sm:$0xff] %v1430
      %1463 = vst [vmem:[%s301 + $0xf0] sm:$0xff] %v1431
      %1464 = vst [vmem:[%s301 + $0xf8] sm:$0xff] %v1432
      %s1465 = smul.u32 16, %s21
      %p1466 = scmp.lt.s32.totalorder %s20, 1
      %s1467 = scalar_select %p1466, %s20, 1
      %p1468 = scmp.lt.s32.totalorder %s1465, 15
      %s1469 = scalar_select %p1468, %s1465, 15
      %s1470 = smul.addr %s1469, 2
      %s1471 = smul.addr %s1467, 32
      %s1472 = sadd.s32 %s1470, %s1471
      %s1473 = smul.addr %s1472, 8
      %s1474 = scalar_lea.vmem %s5, %s1473
      // Predicated region
      $region41: #{depthwise_separable_conv.1} parent=39 // pred_check
        %p1475 = pneg %p167
      $region42: #{depthwise_separable_conv.1} parent=39 // pred_check_branch
        %1477 = sbr.rel (%p1475) target = $region44
      $region43: #{depthwise_separable_conv.1} parent=39 // pred_region
        %s1478 = smul.u32 16, %s21
      $region44: #{depthwise_separable_conv.1} parent=39 // pred_fallthru
        _
    $region40: #{depthwise_separable_conv.1} parent=5 // pred_fallthru
      _
    %p1479 = scmp.le.s32.totalorder 2, %s11
    // Predicated region
    $region45: #{depthwise_separable_conv.1} parent=5 // pred_check
      %p1480 = pneg %p1479
    $region46: #{depthwise_separable_conv.1} parent=5 // pred_check_branch
      %1482 = sbr.rel (%p1480) target = $region48
    $region47: #{depthwise_separable_conv.1} parent=5 // pred_region
      %s1483 = ssub.s32 %s11, 2
      // Predicated region
      $region49: #{depthwise_separable_conv.1} parent=47 // pred_check
        %p1484 = pneg %p173
      $region50: #{depthwise_separable_conv.1} parent=47 // pred_check_branch
        %1486 = sbr.rel (%p1484) target = $region52
      $region51: #{depthwise_separable_conv.1} parent=47 // pred_region
        %s1487 = smul.u32 16, %s23
        %p1488 = scmp.lt.s32.totalorder %s22, 1
        %s1489 = scalar_select %p1488, %s22, 1
        %p1490 = scmp.lt.s32.totalorder %s1487, 15
        %s1491 = scalar_select %p1490, %s1487, 15
        %s1492 = smul.addr %s1491, 2
        %s1493 = smul.addr %s1489, 32
        %s1494 = sadd.s32 %s1492, %s1493
        %s1495 = smul.addr %s1494, 8
        %s1496 = scalar_lea.vmem %s5, %s1495
      $region52: #{depthwise_separable_conv.1} parent=47 // pred_fallthru
        _
    $region48: #{depthwise_separable_conv.1} parent=5 // pred_fallthru
      _
  $region6: #{depthwise_separable_conv.1} parent=0 // loop_footer
    %s15 = sadd.s32 1, %s11
  $region7: #{depthwise_separable_conv.1} parent=0 // loop_footer_branch
    %10 = sbr.rel target = $region3
  $region8: #{depthwise_separable_conv.1} parent=0 // loop_exit
    _

</llo_original>
